<compile_context>
chip_gen: v7x
topology: tpu7x:2x2x1
jax: 0.10.0
libtpu: 0.0.40
codegen_flags: <defaults>
</compile_context>

<pallas_src>
import functools

import jax
import jax.numpy as jnp
from jax.experimental import pallas as pl
from jax.experimental.pallas import tpu as pltpu


# ------------------------------ fused kernel --------------------------------

def _channel_attention_kernel(q_ref, k_ref, v_ref,
                              qw_ref, qb_ref, kw_ref, kb_ref,
                              vw_ref, vb_ref, pw_ref, pb_ref,
                              o_ref, *, n_heads, scale):
    # q_ref: (HW, Cq); k_ref, v_ref: (HW, Ck); param refs: (1, C); o_ref: (HW, Cq)
    # depthwise 1x1 conv projections == per-channel affine (done in VMEM, fused)
    q = q_ref[...].astype(jnp.float32) * qw_ref[...] + qb_ref[...]
    k = k_ref[...].astype(jnp.float32) * kw_ref[...] + kb_ref[...]
    v = v_ref[...].astype(jnp.float32) * vw_ref[...] + vb_ref[...]

    cq = q.shape[-1]
    ck = k.shape[-1]
    dq = cq // n_heads
    dk = ck // n_heads

    # One explicit transpose so every matmul below is a natural (M,K)x(K,N).
    kt = k.T                                        # (Ck, HW)

    head_outs = []
    for h in range(n_heads):                        # static unroll; heads stay in VMEM
        qh = q[:, h * dq:(h + 1) * dq]              # (HW, dq)
        kth = kt[h * dk:(h + 1) * dk, :]            # (dk, HW)
        vh = v[:, h * dk:(h + 1) * dk]              # (HW, dk)

        # scores^T[dk, dq] = sum_hw k[hw, dk] * q[hw, dq]
        st = jnp.dot(kth, qh, preferred_element_type=jnp.float32) * scale
        st = st - jnp.max(st, axis=0, keepdims=True)      # softmax over dk (axis 0)
        p = jnp.exp(st)
        att_t = p * pl.reciprocal(jnp.sum(p, axis=0, keepdims=True), approx=True)

        # out_h[hw, dq] = sum_dk v[hw, dk] * att[dq, dk]
        head_outs.append(jnp.dot(vh, att_t, preferred_element_type=jnp.float32))

    out = head_outs[0] if n_heads == 1 else jnp.concatenate(head_outs, axis=-1)
    # output depthwise projection (per-channel affine), single lane-dense store
    o_ref[...] = (out * pw_ref[...] + pb_ref[...]).astype(o_ref.dtype)


def channel_attention_pallas(x, params, n_heads):
    """x = [q, k, v]: q (B, HW, Cq); k, v (B, HW, Ck). Returns (B, HW, Cq)."""
    q, k, v = x
    B, HW, Cq = q.shape
    Ck = k.shape[-1]
    assert Cq % n_heads == 0 and Ck % n_heads == 0
    scale = float(Ck) ** (-0.5)          # matches PyTorch: c = k.shape[2]; c ** -0.5

    def tok_spec(c):
        return pl.BlockSpec((None, HW, c), lambda b: (b, 0, 0))

    def par_spec(c):
        return pl.BlockSpec((1, c), lambda b: (0, 0))

    return pl.pallas_call(
        functools.partial(_channel_attention_kernel, n_heads=n_heads, scale=scale),
        out_shape=jax.ShapeDtypeStruct((B, HW, Cq), q.dtype),
        grid=(B,),
        in_specs=[tok_spec(Cq), tok_spec(Ck), tok_spec(Ck),
                  par_spec(Cq), par_spec(Cq),
                  par_spec(Ck), par_spec(Ck),
                  par_spec(Ck), par_spec(Ck),
                  par_spec(Cq), par_spec(Cq)],
        out_specs=tok_spec(Cq),
        compiler_params=pltpu.CompilerParams(dimension_semantics=("parallel",)),
    )(q, k, v,
      params['q_w'], params['q_b'],
      params['k_w'], params['k_b'],
      params['v_w'], params['v_b'],
      params['p_w'], params['p_b'])


# ------------------------- pure-JAX reference (check) ------------------------

def channel_attention_ref(x, params, n_heads):
    q, k, v = x
    qa = q * params['q_w'] + params['q_b']
    ka = k * params['k_w'] + params['k_b']
    va = v * params['v_w'] + params['v_b']
    B, HW, Cq = qa.shape
    Ck = ka.shape[-1]
    scale = float(Ck) ** (-0.5)
    qh = qa.reshape(B, HW, n_heads, Cq // n_heads).transpose(0, 2, 3, 1)  # (B,h,dq,HW)
    kh = ka.reshape(B, HW, n_heads, Ck // n_heads).transpose(0, 2, 3, 1)  # (B,h,dk,HW)
    vh = va.reshape(B, HW, n_heads, Ck // n_heads).transpose(0, 2, 3, 1)  # (B,h,dk,HW)
    s = jnp.einsum('bhcw,bhkw->bhck', qh, kh) * scale                     # (B,h,dq,dk)
    att = jax.nn.softmax(s, axis=-1)
    out = jnp.einsum('bhck,bhkw->bhcw', att, vh)                          # (B,h,dq,HW)
    out = out.transpose(0, 3, 1, 2).reshape(B, HW, Cq)
    return out * params['p_w'] + params['p_b']


# ------------------------------ parameter init -------------------------------

def init_channel_attention_params(key, in_features, out_features):
    ks = jax.random.split(key, 8)

    def w(k, n):
        return 1.0 + 0.2 * jax.random.normal(k, (1, n), jnp.float32)

    def b(k, n):
        return 0.1 * jax.random.normal(k, (1, n), jnp.float32)

    return dict(q_w=w(ks[0], out_features), q_b=b(ks[1], out_features),
                k_w=w(ks[2], in_features), k_b=b(ks[3], in_features),
                v_w=w(ks[4], in_features), v_b=b(ks[5], in_features),
                p_w=w(ks[6], out_features), p_b=b(ks[7], out_features))


# ----------------------------------- main ------------------------------------

if __name__ == "__main__":
    key = jax.random.PRNGKey(0)

    B, HW = 2, 64                     # HW = 8*8 pooled tokens
    in_features = 256                 # channels of k/v (concat of scales in DCA)
    out_features = 128                # channels of q / output (lane-dense: 128)

    key, kq, kk, kv, kp = jax.random.split(key, 5)
    q = jax.random.normal(kq, (B, HW, out_features), jnp.float32)
    k = jax.random.normal(kk, (B, HW, in_features), jnp.float32)
    v = jax.random.normal(kv, (B, HW, in_features), jnp.float32)
    params = init_channel_attention_params(kp, in_features, out_features)

    for n_heads in (1, 2):            # DCA default is 1; 2 exercises the head loop
        out = channel_attention_pallas([q, k, v], params, n_heads)
        out = jax.block_until_ready(out)
        ref = channel_attention_ref([q, k, v], params, n_heads)

        assert out.shape == (B, HW, out_features)
        assert bool(jnp.all(jnp.isfinite(out)))
        max_err = float(jnp.max(jnp.abs(out - ref)))
        assert bool(jnp.allclose(out, ref, rtol=2e-2, atol=2e-2)), \
            f"n_heads={n_heads}: max abs err {max_err}"

    print("KERNEL_OK")
</pallas_src>

<mosaic_0001>
module attributes {stable_mosaic.version = 11 : i64} {
  func.func @_channel_attention_kernel(%arg0: i32, %arg1: memref<1x64x128xf32, #tpu.memory_space<vmem>>, %arg2: memref<1x64x256xf32, #tpu.memory_space<vmem>>, %arg3: memref<1x64x256xf32, #tpu.memory_space<vmem>>, %arg4: memref<1x128xf32, #tpu.memory_space<vmem>>, %arg5: memref<1x128xf32, #tpu.memory_space<vmem>>, %arg6: memref<1x256xf32, #tpu.memory_space<vmem>>, %arg7: memref<1x256xf32, #tpu.memory_space<vmem>>, %arg8: memref<1x256xf32, #tpu.memory_space<vmem>>, %arg9: memref<1x256xf32, #tpu.memory_space<vmem>>, %arg10: memref<1x128xf32, #tpu.memory_space<vmem>>, %arg11: memref<1x128xf32, #tpu.memory_space<vmem>>, %arg12: memref<1x64x128xf32, #tpu.memory_space<vmem>>) attributes {dimension_semantics = [#tpu.dimension_semantics<parallel>], iteration_bounds = array<i64: 2>, scalar_prefetch = 0 : i64, scratch_operands = 0 : i64, tpu.core_type = #tpu.core_type<tc>, window_params = [{transform_indices = @transform_0, window_bounds = array<i64: 1, 64, 128>}, {transform_indices = @transform_1, window_bounds = array<i64: 1, 64, 256>}, {transform_indices = @transform_2, window_bounds = array<i64: 1, 64, 256>}, {pipeline_mode = #tpu.pipeline_mode<synchronous>, transform_indices = @transform_3, window_bounds = array<i64: 1, 128>}, {pipeline_mode = #tpu.pipeline_mode<synchronous>, transform_indices = @transform_4, window_bounds = array<i64: 1, 128>}, {pipeline_mode = #tpu.pipeline_mode<synchronous>, transform_indices = @transform_5, window_bounds = array<i64: 1, 256>}, {pipeline_mode = #tpu.pipeline_mode<synchronous>, transform_indices = @transform_6, window_bounds = array<i64: 1, 256>}, {pipeline_mode = #tpu.pipeline_mode<synchronous>, transform_indices = @transform_7, window_bounds = array<i64: 1, 256>}, {pipeline_mode = #tpu.pipeline_mode<synchronous>, transform_indices = @transform_8, window_bounds = array<i64: 1, 256>}, {pipeline_mode = #tpu.pipeline_mode<synchronous>, transform_indices = @transform_9, window_bounds = array<i64: 1, 128>}, {pipeline_mode = #tpu.pipeline_mode<synchronous>, transform_indices = @transform_10, window_bounds = array<i64: 1, 128>}, {transform_indices = @transform_11, window_bounds = array<i64: 1, 64, 128>}]} {
    %c0 = arith.constant 0 : index
    %c0_0 = arith.constant 0 : index
    %c0_1 = arith.constant 0 : index
    %0 = vector.load %arg1[%c0, %c0_0, %c0_1] : memref<1x64x128xf32, #tpu.memory_space<vmem>>, vector<1x64x128xf32>
    %1 = vector.shape_cast %0 : vector<1x64x128xf32> to vector<64x128xf32>
    %c0_2 = arith.constant 0 : index
    %c0_3 = arith.constant 0 : index
    %2 = vector.load %arg4[%c0_2, %c0_3] : memref<1x128xf32, #tpu.memory_space<vmem>>, vector<1x128xf32>
    %3 = vector.broadcast %2 : vector<1x128xf32> to vector<64x128xf32>
    %4 = arith.mulf %1, %3 : vector<64x128xf32>
    %c0_4 = arith.constant 0 : index
    %c0_5 = arith.constant 0 : index
    %5 = vector.load %arg5[%c0_4, %c0_5] : memref<1x128xf32, #tpu.memory_space<vmem>>, vector<1x128xf32>
    %6 = vector.broadcast %5 : vector<1x128xf32> to vector<64x128xf32>
    %7 = arith.addf %4, %6 : vector<64x128xf32>
    %c0_6 = arith.constant 0 : index
    %c0_7 = arith.constant 0 : index
    %c0_8 = arith.constant 0 : index
    %8 = vector.load %arg2[%c0_6, %c0_7, %c0_8] : memref<1x64x256xf32, #tpu.memory_space<vmem>>, vector<1x64x256xf32>
    %9 = vector.shape_cast %8 : vector<1x64x256xf32> to vector<64x256xf32>
    %c0_9 = arith.constant 0 : index
    %c0_10 = arith.constant 0 : index
    %10 = vector.load %arg6[%c0_9, %c0_10] : memref<1x256xf32, #tpu.memory_space<vmem>>, vector<1x256xf32>
    %11 = vector.broadcast %10 : vector<1x256xf32> to vector<64x256xf32>
    %12 = arith.mulf %9, %11 : vector<64x256xf32>
    %c0_11 = arith.constant 0 : index
    %c0_12 = arith.constant 0 : index
    %13 = vector.load %arg7[%c0_11, %c0_12] : memref<1x256xf32, #tpu.memory_space<vmem>>, vector<1x256xf32>
    %14 = vector.broadcast %13 : vector<1x256xf32> to vector<64x256xf32>
    %15 = arith.addf %12, %14 : vector<64x256xf32>
    %c0_13 = arith.constant 0 : index
    %c0_14 = arith.constant 0 : index
    %c0_15 = arith.constant 0 : index
    %16 = vector.load %arg3[%c0_13, %c0_14, %c0_15] : memref<1x64x256xf32, #tpu.memory_space<vmem>>, vector<1x64x256xf32>
    %17 = vector.shape_cast %16 : vector<1x64x256xf32> to vector<64x256xf32>
    %c0_16 = arith.constant 0 : index
    %c0_17 = arith.constant 0 : index
    %18 = vector.load %arg8[%c0_16, %c0_17] : memref<1x256xf32, #tpu.memory_space<vmem>>, vector<1x256xf32>
    %19 = vector.broadcast %18 : vector<1x256xf32> to vector<64x256xf32>
    %20 = arith.mulf %17, %19 : vector<64x256xf32>
    %c0_18 = arith.constant 0 : index
    %c0_19 = arith.constant 0 : index
    %21 = vector.load %arg9[%c0_18, %c0_19] : memref<1x256xf32, #tpu.memory_space<vmem>>, vector<1x256xf32>
    %22 = vector.broadcast %21 : vector<1x256xf32> to vector<64x256xf32>
    %23 = arith.addf %20, %22 : vector<64x256xf32>
    %24 = tpu.transpose %15, [1, 0] : vector<64x256xf32> -> vector<256x64xf32>
    %cst = arith.constant dense<0.000000e+00> : vector<256x128xf32>
    %25 = tpu.matmul %24, %7, %cst {dimension_numbers = #tpu.dot_dimension_numbers<[1], [0], [0], [1], [0, 0, 1, 1], [], []>} : vector<256x64xf32>, vector<64x128xf32>, vector<256x128xf32> -> vector<256x128xf32>
    %cst_20 = arith.constant 6.250000e-02 : f32
    %26 = vector.broadcast %cst_20 : f32 to vector<256x128xf32>
    %27 = arith.mulf %25, %26 : vector<256x128xf32>
    %cst_21 = arith.constant dense<0xFF800000> : vector<128xf32>
    %28 = vector.multi_reduction <maximumf>, %27, %cst_21 [0] : vector<256x128xf32> to vector<128xf32>
    %29 = vector.shape_cast %28 : vector<128xf32> to vector<1x128xf32>
    %30 = vector.broadcast %29 : vector<1x128xf32> to vector<256x128xf32>
    %31 = arith.subf %27, %30 : vector<256x128xf32>
    %32 = math.exp %31 : vector<256x128xf32>
    %cst_22 = arith.constant dense<0.000000e+00> : vector<128xf32>
    %33 = vector.multi_reduction <add>, %32, %cst_22 [0] : vector<256x128xf32> to vector<128xf32>
    %34 = vector.shape_cast %33 : vector<128xf32> to vector<1x128xf32>
    %35 = tpu.reciprocal %34 {approx = true} : vector<1x128xf32> -> vector<1x128xf32>
    %36 = vector.broadcast %35 : vector<1x128xf32> to vector<256x128xf32>
    %37 = arith.mulf %32, %36 : vector<256x128xf32>
    %cst_23 = arith.constant dense<0.000000e+00> : vector<64x128xf32>
    %38 = tpu.matmul %23, %37, %cst_23 {dimension_numbers = #tpu.dot_dimension_numbers<[1], [0], [0], [1], [0, 0, 1, 1], [], []>} : vector<64x256xf32>, vector<256x128xf32>, vector<64x128xf32> -> vector<64x128xf32>
    %c0_24 = arith.constant 0 : index
    %c0_25 = arith.constant 0 : index
    %39 = vector.load %arg10[%c0_24, %c0_25] : memref<1x128xf32, #tpu.memory_space<vmem>>, vector<1x128xf32>
    %40 = vector.broadcast %39 : vector<1x128xf32> to vector<64x128xf32>
    %41 = arith.mulf %38, %40 : vector<64x128xf32>
    %c0_26 = arith.constant 0 : index
    %c0_27 = arith.constant 0 : index
    %42 = vector.load %arg11[%c0_26, %c0_27] : memref<1x128xf32, #tpu.memory_space<vmem>>, vector<1x128xf32>
    %43 = vector.broadcast %42 : vector<1x128xf32> to vector<64x128xf32>
    %44 = arith.addf %41, %43 : vector<64x128xf32>
    %c0_28 = arith.constant 0 : index
    %c0_29 = arith.constant 0 : index
    %c0_30 = arith.constant 0 : index
    %45 = vector.load %arg12[%c0_28, %c0_29, %c0_30] : memref<1x64x128xf32, #tpu.memory_space<vmem>>, vector<1x64x128xf32>
    %46 = vector.shape_cast %45 : vector<1x64x128xf32> to vector<64x128xf32>
    %47 = vector.shape_cast %44 : vector<64x128xf32> to vector<1x64x128xf32>
    tpu.vector_store %arg12[%c0_28, %c0_29, %c0_30], %47 {strides = array<i32>} : memref<1x64x128xf32, #tpu.memory_space<vmem>>, vector<1x64x128xf32>,
    return
  }
  func.func @transform_0(%arg0: i32) -> (i32, i32, i32) {
    %c0_i32 = arith.constant 0 : i32
    %c0_i32_0 = arith.constant 0 : i32
    %c0_i32_1 = arith.constant 0 : i32
    return %arg0, %c0_i32, %c0_i32_0 : i32, i32, i32
  }
  func.func @transform_1(%arg0: i32) -> (i32, i32, i32) {
    %c0_i32 = arith.constant 0 : i32
    %c0_i32_0 = arith.constant 0 : i32
    %c0_i32_1 = arith.constant 0 : i32
    return %arg0, %c0_i32, %c0_i32_0 : i32, i32, i32
  }
  func.func @transform_2(%arg0: i32) -> (i32, i32, i32) {
    %c0_i32 = arith.constant 0 : i32
    %c0_i32_0 = arith.constant 0 : i32
    %c0_i32_1 = arith.constant 0 : i32
    return %arg0, %c0_i32, %c0_i32_0 : i32, i32, i32
  }
  func.func @transform_3(%arg0: i32) -> (i32, i32) {
    %c0_i32 = arith.constant 0 : i32
    %c0_i32_0 = arith.constant 0 : i32
    %c0_i32_1 = arith.constant 0 : i32
    return %c0_i32, %c0_i32_0 : i32, i32
  }
  func.func @transform_4(%arg0: i32) -> (i32, i32) {
    %c0_i32 = arith.constant 0 : i32
    %c0_i32_0 = arith.constant 0 : i32
    %c0_i32_1 = arith.constant 0 : i32
    return %c0_i32, %c0_i32_0 : i32, i32
  }
  func.func @transform_5(%arg0: i32) -> (i32, i32) {
    %c0_i32 = arith.constant 0 : i32
    %c0_i32_0 = arith.constant 0 : i32
    %c0_i32_1 = arith.constant 0 : i32
    return %c0_i32, %c0_i32_0 : i32, i32
  }
  func.func @transform_6(%arg0: i32) -> (i32, i32) {
    %c0_i32 = arith.constant 0 : i32
    %c0_i32_0 = arith.constant 0 : i32
    %c0_i32_1 = arith.constant 0 : i32
    return %c0_i32, %c0_i32_0 : i32, i32
  }
  func.func @transform_7(%arg0: i32) -> (i32, i32) {
    %c0_i32 = arith.constant 0 : i32
    %c0_i32_0 = arith.constant 0 : i32
    %c0_i32_1 = arith.constant 0 : i32
    return %c0_i32, %c0_i32_0 : i32, i32
  }
  func.func @transform_8(%arg0: i32) -> (i32, i32) {
    %c0_i32 = arith.constant 0 : i32
    %c0_i32_0 = arith.constant 0 : i32
    %c0_i32_1 = arith.constant 0 : i32
    return %c0_i32, %c0_i32_0 : i32, i32
  }
  func.func @transform_9(%arg0: i32) -> (i32, i32) {
    %c0_i32 = arith.constant 0 : i32
    %c0_i32_0 = arith.constant 0 : i32
    %c0_i32_1 = arith.constant 0 : i32
    return %c0_i32, %c0_i32_0 : i32, i32
  }
  func.func @transform_10(%arg0: i32) -> (i32, i32) {
    %c0_i32 = arith.constant 0 : i32
    %c0_i32_0 = arith.constant 0 : i32
    %c0_i32_1 = arith.constant 0 : i32
    return %c0_i32, %c0_i32_0 : i32, i32
  }
  func.func @transform_11(%arg0: i32) -> (i32, i32, i32) {
    %c0_i32 = arith.constant 0 : i32
    %c0_i32_0 = arith.constant 0 : i32
    %c0_i32_1 = arith.constant 0 : i32
    return %arg0, %c0_i32, %c0_i32_0 : i32, i32, i32
  }
}

</mosaic_0001>

<llo_original>
// kernel: tpu_custom_call.1
$region0: #{tpu_custom_call.1}
  #allocation0 [shape = 'u32[]', space=smem, size = 0x4, offset = 0x4, fixed_abs, tag = 'smem constant byte address 0x4 - core index']
  #allocation1 [shape = 'u32[144,128]{1,0:T(1,128)}', space=vmem, size = 0x12000, scoped, tag = 'internal scratch']
  %s0 = inlined_call_operand.hbm [shape: f32[2,64,128], index: 0, kind: input, shape index: {}]
  %s1 = inlined_call_operand.hbm [shape: f32[2,64,256], index: 1, kind: input, shape index: {}]
  %s2 = inlined_call_operand.hbm [shape: f32[2,64,256], index: 2, kind: input, shape index: {}]
  %s3 = inlined_call_operand.vmem [shape: f32[1,128], index: 3, kind: input, shape index: {}]
  %s4 = inlined_call_operand.vmem [shape: f32[1,128], index: 4, kind: input, shape index: {}]
  %s5 = inlined_call_operand.vmem [shape: f32[1,256], index: 5, kind: input, shape index: {}]
  %s6 = inlined_call_operand.vmem [shape: f32[1,256], index: 6, kind: input, shape index: {}]
  %s7 = inlined_call_operand.vmem [shape: f32[1,256], index: 7, kind: input, shape index: {}]
  %s8 = inlined_call_operand.vmem [shape: f32[1,256], index: 8, kind: input, shape index: {}]
  %s9 = inlined_call_operand.vmem [shape: f32[1,128], index: 9, kind: input, shape index: {}]
  %s10 = inlined_call_operand.vmem [shape: f32[1,128], index: 10, kind: input, shape index: {}]
  %s11 = inlined_call_operand.hbm [shape: f32[2,64,128], index: 11, kind: output, shape index: {}]
  %s12 = sld [smem:[#allocation0]]
  $region89: #{tpu_custom_call.1} parent=0
    _
  %s14 = ssub.s32 1, %s12
  %s15 = scalar_select 0, %s14, %s12
  $region1: #{tpu_custom_call.1} parent=0
    #allocation2 [shape = 'u8[65536]{0}', space=vmem, size = 0x10000, scoped, tag = 'input window, operand 0']
    #allocation3 [shape = 's32[2]{0}', space=sflag, size = 0x8, scoped, tag = 'scoped memory for tpu_custom_call.1']
    #allocation4 [shape = 's32[2]{0}', space=sflag, size = 0x8, scoped, tag = 'scoped memory for tpu_custom_call.1']
    #allocation5 [shape = 'u8[131072]{0}', space=vmem, size = 0x20000, scoped, tag = 'input window, operand 1']
    #allocation6 [shape = 's32[2]{0}', space=sflag, size = 0x8, scoped, tag = 'scoped memory for tpu_custom_call.1']
    #allocation7 [shape = 'u8[131072]{0}', space=vmem, size = 0x20000, scoped, tag = 'input window, operand 2']
    #allocation8 [shape = 'u8[65536]{0}', space=vmem, size = 0x10000, scoped, tag = 'output window, operand 0']
    %16 = vsyncpa [#allocation3], 0
    %s17 = scalar_lea.sflag [#allocation3], 1
    %18 = vsyncpa %s17, 0
    %19 = vsyncpa [#allocation6], 0
    %s20 = scalar_lea.sflag [#allocation6], 1
    %21 = vsyncpa %s20, 0
    %22 = vsyncpa [#allocation4], 0
    %s23 = scalar_lea.sflag [#allocation4], 1
    %24 = vsyncpa %s23, 0
    loop: start=0, step=1, limit=4
    $region2: #{tpu_custom_call.1} parent=1 // loop_pre_header
      _
    $region3: #{tpu_custom_call.1} parent=1 // loop_header
      %s26 = sphi 0, %s30
      %p27 = scmp.ge.s32.totalorder %s26, 4
      %s36 = sphi 0, %s38
      %s39 = sphi 0, %s36
      %s40 = sphi 0, %s39
      %s56 = sphi 0, %s40
      %s62 = sphi 0, %s64
      %s65 = sphi 0, %s62
      %s66 = sphi 0, %s65
      %s82 = sphi 0, %s66
      %s88 = sphi 0, %s90
      %s91 = sphi 0, %s88
      %s92 = sphi 0, %s91
      %s108 = sphi 0, %s92
      %s112 = sphi 0, %s112
      %s114 = sphi 0, %s112
      %s115 = sphi 0, %s114
      %s129 = sphi 0, %s115
      %s133 = sphi 0, %s133
      %s135 = sphi 0, %s133
      %s136 = sphi 0, %s135
      %s150 = sphi 0, %s136
      %s154 = sphi 0, %s154
      %s156 = sphi 0, %s154
      %s157 = sphi 0, %s156
      %s171 = sphi 0, %s157
      %s175 = sphi 0, %s175
      %s177 = sphi 0, %s175
      %s178 = sphi 0, %s177
      %s192 = sphi 0, %s178
      %s196 = sphi 0, %s196
      %s198 = sphi 0, %s196
      %s199 = sphi 0, %s198
      %s213 = sphi 0, %s199
      %s217 = sphi 0, %s217
      %s219 = sphi 0, %s217
      %s220 = sphi 0, %s219
      %s234 = sphi 0, %s220
      %s238 = sphi 0, %s238
      %s240 = sphi 0, %s238
      %s241 = sphi 0, %s240
      %s255 = sphi 0, %s241
      %s259 = sphi 0, %s259
      %s261 = sphi 0, %s259
      %s262 = sphi 0, %s261
      %s276 = sphi 0, %s262
      %s282 = sphi 0, %s284
      %s285 = sphi 0, %s282
      %s286 = sphi 0, %s285
      %s302 = sphi 0, %s286
    $region4: #{tpu_custom_call.1} parent=1 // loop_header_branch
      %29 = sbr.rel (%p27) target = $region8
    $region5: #{tpu_custom_call.1} parent=1 // loop_body
      %s31 = ssub.s32 %s26, 1
      %s32 = ssub.s32 %s26, 2
      %s33 = sadd.s32 %s26, 1
      %s34 = ssub.s32 %s26, %s33
      %p35 = scmp.eq.s32.totalorder %s34, 0
      %s37 = sadd.s32 %s36, 1
      %s38 = scalar_select %p35, %s36, %s37
      %p41 = pneg %p35
      %p42 = scmp.eq.s32.totalorder %s26, 1
      %p43 = por %p41, %p42
      %p44 = scmp.ne.s32.totalorder %s36, %s39
      %p45 = scmp.eq.s32.totalorder %s26, 0
      %p46 = por %p44, %p45
      %p47 = scmp.ne.s32.totalorder %s36, %s39
      %p48 = scmp.eq.s32.totalorder %s31, 1
      %p49 = por %p47, %p48
      %p50 = scmp.ne.s32.totalorder %s39, %s40
      %p51 = scmp.eq.s32.totalorder %s31, 0
      %p52 = por %p50, %p51
      %p53 = scmp.ne.s32.totalorder %s39, %s40
      %p54 = scmp.eq.s32.totalorder %s32, 1
      %p55 = por %p53, %p54
      %p57 = scmp.ne.s32.totalorder %s40, %s56
      %p58 = scmp.eq.s32.totalorder %s32, 0
      %p59 = por %p57, %p58
      %s60 = ssub.s32 %s26, %s33
      %p61 = scmp.eq.s32.totalorder %s60, 0
      %s63 = sadd.s32 %s62, 1
      %s64 = scalar_select %p61, %s62, %s63
      %p67 = pneg %p61
      %p68 = scmp.eq.s32.totalorder %s26, 1
      %p69 = por %p67, %p68
      %p70 = scmp.ne.s32.totalorder %s62, %s65
      %p71 = scmp.eq.s32.totalorder %s26, 0
      %p72 = por %p70, %p71
      %p73 = scmp.ne.s32.totalorder %s62, %s65
      %p74 = scmp.eq.s32.totalorder %s31, 1
      %p75 = por %p73, %p74
      %p76 = scmp.ne.s32.totalorder %s65, %s66
      %p77 = scmp.eq.s32.totalorder %s31, 0
      %p78 = por %p76, %p77
      %p79 = scmp.ne.s32.totalorder %s65, %s66
      %p80 = scmp.eq.s32.totalorder %s32, 1
      %p81 = por %p79, %p80
      %p83 = scmp.ne.s32.totalorder %s66, %s82
      %p84 = scmp.eq.s32.totalorder %s32, 0
      %p85 = por %p83, %p84
      %s86 = ssub.s32 %s26, %s33
      %p87 = scmp.eq.s32.totalorder %s86, 0
      %s89 = sadd.s32 %s88, 1
      %s90 = scalar_select %p87, %s88, %s89
      %p93 = pneg %p87
      %p94 = scmp.eq.s32.totalorder %s26, 1
      %p95 = por %p93, %p94
      %p96 = scmp.ne.s32.totalorder %s88, %s91
      %p97 = scmp.eq.s32.totalorder %s26, 0
      %p98 = por %p96, %p97
      %p99 = scmp.ne.s32.totalorder %s88, %s91
      %p100 = scmp.eq.s32.totalorder %s31, 1
      %p101 = por %p99, %p100
      %p102 = scmp.ne.s32.totalorder %s91, %s92
      %p103 = scmp.eq.s32.totalorder %s31, 0
      %p104 = por %p102, %p103
      %p105 = scmp.ne.s32.totalorder %s91, %s92
      %p106 = scmp.eq.s32.totalorder %s32, 1
      %p107 = por %p105, %p106
      %p109 = scmp.ne.s32.totalorder %s92, %s108
      %p110 = scmp.eq.s32.totalorder %s32, 0
      %p111 = por %p109, %p110
      %s113 = sadd.s32 %s112, 1
      %p116 = scmp.eq.s32.totalorder %s26, 1
      %p117 = scmp.ne.s32.totalorder %s112, %s114
      %p118 = scmp.eq.s32.totalorder %s26, 0
      %p119 = por %p117, %p118
      %p120 = scmp.ne.s32.totalorder %s112, %s114
      %p121 = scmp.eq.s32.totalorder %s31, 1
      %p122 = por %p120, %p121
      %p123 = scmp.ne.s32.totalorder %s114, %s115
      %p124 = scmp.eq.s32.totalorder %s31, 0
      %p125 = por %p123, %p124
      %p126 = scmp.ne.s32.totalorder %s114, %s115
      %p127 = scmp.eq.s32.totalorder %s32, 1
      %p128 = por %p126, %p127
      %p130 = scmp.ne.s32.totalorder %s115, %s129
      %p131 = scmp.eq.s32.totalorder %s32, 0
      %p132 = por %p130, %p131
      %s134 = sadd.s32 %s133, 1
      %p137 = scmp.eq.s32.totalorder %s26, 1
      %p138 = scmp.ne.s32.totalorder %s133, %s135
      %p139 = scmp.eq.s32.totalorder %s26, 0
      %p140 = por %p138, %p139
      %p141 = scmp.ne.s32.totalorder %s133, %s135
      %p142 = scmp.eq.s32.totalorder %s31, 1
      %p143 = por %p141, %p142
      %p144 = scmp.ne.s32.totalorder %s135, %s136
      %p145 = scmp.eq.s32.totalorder %s31, 0
      %p146 = por %p144, %p145
      %p147 = scmp.ne.s32.totalorder %s135, %s136
      %p148 = scmp.eq.s32.totalorder %s32, 1
      %p149 = por %p147, %p148
      %p151 = scmp.ne.s32.totalorder %s136, %s150
      %p152 = scmp.eq.s32.totalorder %s32, 0
      %p153 = por %p151, %p152
      %s155 = sadd.s32 %s154, 1
      %p158 = scmp.eq.s32.totalorder %s26, 1
      %p159 = scmp.ne.s32.totalorder %s154, %s156
      %p160 = scmp.eq.s32.totalorder %s26, 0
      %p161 = por %p159, %p160
      %p162 = scmp.ne.s32.totalorder %s154, %s156
      %p163 = scmp.eq.s32.totalorder %s31, 1
      %p164 = por %p162, %p163
      %p165 = scmp.ne.s32.totalorder %s156, %s157
      %p166 = scmp.eq.s32.totalorder %s31, 0
      %p167 = por %p165, %p166
      %p168 = scmp.ne.s32.totalorder %s156, %s157
      %p169 = scmp.eq.s32.totalorder %s32, 1
      %p170 = por %p168, %p169
      %p172 = scmp.ne.s32.totalorder %s157, %s171
      %p173 = scmp.eq.s32.totalorder %s32, 0
      %p174 = por %p172, %p173
      %s176 = sadd.s32 %s175, 1
      %p179 = scmp.eq.s32.totalorder %s26, 1
      %p180 = scmp.ne.s32.totalorder %s175, %s177
      %p181 = scmp.eq.s32.totalorder %s26, 0
      %p182 = por %p180, %p181
      %p183 = scmp.ne.s32.totalorder %s175, %s177
      %p184 = scmp.eq.s32.totalorder %s31, 1
      %p185 = por %p183, %p184
      %p186 = scmp.ne.s32.totalorder %s177, %s178
      %p187 = scmp.eq.s32.totalorder %s31, 0
      %p188 = por %p186, %p187
      %p189 = scmp.ne.s32.totalorder %s177, %s178
      %p190 = scmp.eq.s32.totalorder %s32, 1
      %p191 = por %p189, %p190
      %p193 = scmp.ne.s32.totalorder %s178, %s192
      %p194 = scmp.eq.s32.totalorder %s32, 0
      %p195 = por %p193, %p194
      %s197 = sadd.s32 %s196, 1
      %p200 = scmp.eq.s32.totalorder %s26, 1
      %p201 = scmp.ne.s32.totalorder %s196, %s198
      %p202 = scmp.eq.s32.totalorder %s26, 0
      %p203 = por %p201, %p202
      %p204 = scmp.ne.s32.totalorder %s196, %s198
      %p205 = scmp.eq.s32.totalorder %s31, 1
      %p206 = por %p204, %p205
      %p207 = scmp.ne.s32.totalorder %s198, %s199
      %p208 = scmp.eq.s32.totalorder %s31, 0
      %p209 = por %p207, %p208
      %p210 = scmp.ne.s32.totalorder %s198, %s199
      %p211 = scmp.eq.s32.totalorder %s32, 1
      %p212 = por %p210, %p211
      %p214 = scmp.ne.s32.totalorder %s199, %s213
      %p215 = scmp.eq.s32.totalorder %s32, 0
      %p216 = por %p214, %p215
      %s218 = sadd.s32 %s217, 1
      %p221 = scmp.eq.s32.totalorder %s26, 1
      %p222 = scmp.ne.s32.totalorder %s217, %s219
      %p223 = scmp.eq.s32.totalorder %s26, 0
      %p224 = por %p222, %p223
      %p225 = scmp.ne.s32.totalorder %s217, %s219
      %p226 = scmp.eq.s32.totalorder %s31, 1
      %p227 = por %p225, %p226
      %p228 = scmp.ne.s32.totalorder %s219, %s220
      %p229 = scmp.eq.s32.totalorder %s31, 0
      %p230 = por %p228, %p229
      %p231 = scmp.ne.s32.totalorder %s219, %s220
      %p232 = scmp.eq.s32.totalorder %s32, 1
      %p233 = por %p231, %p232
      %p235 = scmp.ne.s32.totalorder %s220, %s234
      %p236 = scmp.eq.s32.totalorder %s32, 0
      %p237 = por %p235, %p236
      %s239 = sadd.s32 %s238, 1
      %p242 = scmp.eq.s32.totalorder %s26, 1
      %p243 = scmp.ne.s32.totalorder %s238, %s240
      %p244 = scmp.eq.s32.totalorder %s26, 0
      %p245 = por %p243, %p244
      %p246 = scmp.ne.s32.totalorder %s238, %s240
      %p247 = scmp.eq.s32.totalorder %s31, 1
      %p248 = por %p246, %p247
      %p249 = scmp.ne.s32.totalorder %s240, %s241
      %p250 = scmp.eq.s32.totalorder %s31, 0
      %p251 = por %p249, %p250
      %p252 = scmp.ne.s32.totalorder %s240, %s241
      %p253 = scmp.eq.s32.totalorder %s32, 1
      %p254 = por %p252, %p253
      %p256 = scmp.ne.s32.totalorder %s241, %s255
      %p257 = scmp.eq.s32.totalorder %s32, 0
      %p258 = por %p256, %p257
      %s260 = sadd.s32 %s259, 1
      %p263 = scmp.eq.s32.totalorder %s26, 1
      %p264 = scmp.ne.s32.totalorder %s259, %s261
      %p265 = scmp.eq.s32.totalorder %s26, 0
      %p266 = por %p264, %p265
      %p267 = scmp.ne.s32.totalorder %s259, %s261
      %p268 = scmp.eq.s32.totalorder %s31, 1
      %p269 = por %p267, %p268
      %p270 = scmp.ne.s32.totalorder %s261, %s262
      %p271 = scmp.eq.s32.totalorder %s31, 0
      %p272 = por %p270, %p271
      %p273 = scmp.ne.s32.totalorder %s261, %s262
      %p274 = scmp.eq.s32.totalorder %s32, 1
      %p275 = por %p273, %p274
      %p277 = scmp.ne.s32.totalorder %s262, %s276
      %p278 = scmp.eq.s32.totalorder %s32, 0
      %p279 = por %p277, %p278
      %s280 = ssub.s32 %s26, %s33
      %p281 = scmp.eq.s32.totalorder %s280, 0
      %s283 = sadd.s32 %s282, 1
      %s284 = scalar_select %p281, %s282, %s283
      %p287 = pneg %p281
      %p288 = scmp.eq.s32.totalorder %s26, 1
      %p289 = por %p287, %p288
      %p290 = scmp.ne.s32.totalorder %s282, %s285
      %p291 = scmp.eq.s32.totalorder %s26, 0
      %p292 = por %p290, %p291
      %p293 = scmp.ne.s32.totalorder %s282, %s285
      %p294 = scmp.eq.s32.totalorder %s31, 1
      %p295 = por %p293, %p294
      %p296 = scmp.ne.s32.totalorder %s285, %s286
      %p297 = scmp.eq.s32.totalorder %s31, 0
      %p298 = por %p296, %p297
      %p299 = scmp.ne.s32.totalorder %s285, %s286
      %p300 = scmp.eq.s32.totalorder %s32, 1
      %p301 = por %p299, %p300
      %p303 = scmp.ne.s32.totalorder %s286, %s302
      %p304 = scmp.eq.s32.totalorder %s32, 0
      %p305 = por %p303, %p304
      %p306 = scmp.le.s32.totalorder 1, %s26
      %p307 = scmp.lt.s32.totalorder %s26, 3
      %p308 = pnand %p306, %p307
      %p309 = pneg %p308
      // Predicated region
      $region9: #{tpu_custom_call.1} parent=5 // pred_check
        _
      $region10: #{tpu_custom_call.1} parent=5 // pred_check_branch
        %311 = sbr.rel (%p308) target = $region12
      $region11: #{tpu_custom_call.1} parent=5 // pred_region
        %s312 = ssub.s32 %s26, 1
        // Predicated region
        $region13: #{tpu_custom_call.1} parent=11 // pred_check
          %p313 = pneg %p125
        $region14: #{tpu_custom_call.1} parent=11 // pred_check_branch
          %315 = sbr.rel (%p313) target = $region16
        $region15: #{tpu_custom_call.1} parent=11 // pred_region
          _
        $region16: #{tpu_custom_call.1} parent=11 // pred_fallthru
          _
        // Predicated region
        $region17: #{tpu_custom_call.1} parent=11 // pred_check
          %p316 = pneg %p146
        $region18: #{tpu_custom_call.1} parent=11 // pred_check_branch
          %318 = sbr.rel (%p316) target = $region20
        $region19: #{tpu_custom_call.1} parent=11 // pred_region
          _
        $region20: #{tpu_custom_call.1} parent=11 // pred_fallthru
          _
        // Predicated region
        $region21: #{tpu_custom_call.1} parent=11 // pred_check
          %p319 = pneg %p167
        $region22: #{tpu_custom_call.1} parent=11 // pred_check_branch
          %321 = sbr.rel (%p319) target = $region24
        $region23: #{tpu_custom_call.1} parent=11 // pred_region
          _
        $region24: #{tpu_custom_call.1} parent=11 // pred_fallthru
          _
        // Predicated region
        $region25: #{tpu_custom_call.1} parent=11 // pred_check
          %p322 = pneg %p188
        $region26: #{tpu_custom_call.1} parent=11 // pred_check_branch
          %324 = sbr.rel (%p322) target = $region28
        $region27: #{tpu_custom_call.1} parent=11 // pred_region
          _
        $region28: #{tpu_custom_call.1} parent=11 // pred_fallthru
          _
        // Predicated region
        $region29: #{tpu_custom_call.1} parent=11 // pred_check
          %p325 = pneg %p209
        $region30: #{tpu_custom_call.1} parent=11 // pred_check_branch
          %327 = sbr.rel (%p325) target = $region32
        $region31: #{tpu_custom_call.1} parent=11 // pred_region
          _
        $region32: #{tpu_custom_call.1} parent=11 // pred_fallthru
          _
        // Predicated region
        $region33: #{tpu_custom_call.1} parent=11 // pred_check
          %p328 = pneg %p230
        $region34: #{tpu_custom_call.1} parent=11 // pred_check_branch
          %330 = sbr.rel (%p328) target = $region36
        $region35: #{tpu_custom_call.1} parent=11 // pred_region
          _
        $region36: #{tpu_custom_call.1} parent=11 // pred_fallthru
          _
        // Predicated region
        $region37: #{tpu_custom_call.1} parent=11 // pred_check
          %p331 = pneg %p251
        $region38: #{tpu_custom_call.1} parent=11 // pred_check_branch
          %333 = sbr.rel (%p331) target = $region40
        $region39: #{tpu_custom_call.1} parent=11 // pred_region
          _
        $region40: #{tpu_custom_call.1} parent=11 // pred_fallthru
          _
        // Predicated region
        $region41: #{tpu_custom_call.1} parent=11 // pred_check
          %p334 = pneg %p272
        $region42: #{tpu_custom_call.1} parent=11 // pred_check_branch
          %336 = sbr.rel (%p334) target = $region44
        $region43: #{tpu_custom_call.1} parent=11 // pred_region
          _
        $region44: #{tpu_custom_call.1} parent=11 // pred_fallthru
          _
      $region12: #{tpu_custom_call.1} parent=5 // pred_fallthru
        _
      %p337 = scmp.lt.s32.totalorder %s26, 2
      // Predicated region
      $region45: #{tpu_custom_call.1} parent=5 // pred_check
        %p338 = pneg %p337
      $region46: #{tpu_custom_call.1} parent=5 // pred_check_branch
        %340 = sbr.rel (%p338) target = $region48
      $region47: #{tpu_custom_call.1} parent=5 // pred_region
        // Predicated region
        $region49: #{tpu_custom_call.1} parent=47 // pred_check
          %p341 = pneg %p46
        $region50: #{tpu_custom_call.1} parent=47 // pred_check_branch
          %343 = sbr.rel (%p341) target = $region52
        $region51: #{tpu_custom_call.1} parent=47 // pred_region
          %s344 = sand.u32 %s36, 1
          %s345 = scalar_lea.sflag [#allocation3], %s344
          %s346 = sand.u32 %s36, 1
          %s347 = smul.addr %s346, 64
          %s348 = scalar_lea.vmem [#allocation2], %s347
          %s350 = ssub.s32 1024, 1024
          %351 = vsyncadd %s345, %s350
          %s352 = smul.addr %s26, 8
          %s353 = smul.addr %s352, 128
          %s354 = scalar_lea.hbm %s0, %s353
          %s355 = sshll.u32 %s348, 4
          %s356 = int_to_ptr.vmem [resolvable:$true] %s355
          %361 = dma.hbm_to_vmem [thread:$0]  %s354, 1024, %s356, %s345, 128, 128, 8
        $region52: #{tpu_custom_call.1} parent=47 // pred_fallthru
          _
        // Predicated region
        $region53: #{tpu_custom_call.1} parent=47 // pred_check
          %p362 = pneg %p72
        $region54: #{tpu_custom_call.1} parent=47 // pred_check_branch
          %364 = sbr.rel (%p362) target = $region56
        $region55: #{tpu_custom_call.1} parent=47 // pred_region
          %s365 = sand.u32 %s26, 1
          %s366 = scalar_lea.sflag [#allocation6], %s365
          %s367 = sand.u32 %s62, 1
          %s368 = smul.addr %s367, 128
          %s369 = scalar_lea.vmem [#allocation5], %s368
          %s371 = ssub.s32 2048, 2048
          %372 = vsyncadd %s366, %s371
          %s373 = smul.addr %s26, 16
          %s374 = smul.addr %s373, 128
          %s375 = scalar_lea.hbm %s1, %s374
          %s376 = sshll.u32 %s369, 4
          %s377 = int_to_ptr.vmem [resolvable:$true] %s376
          %382 = dma.hbm_to_vmem [thread:$0]  %s375, 2048, %s377, %s366, 256, 256, 16
        $region56: #{tpu_custom_call.1} parent=47 // pred_fallthru
          _
        // Predicated region
        $region57: #{tpu_custom_call.1} parent=47 // pred_check
          %p383 = pneg %p98
        $region58: #{tpu_custom_call.1} parent=47 // pred_check_branch
          %385 = sbr.rel (%p383) target = $region60
        $region59: #{tpu_custom_call.1} parent=47 // pred_region
          %s386 = sand.u32 %s26, 1
          %s387 = scalar_lea.sflag [#allocation6], %s386
          %s388 = sand.u32 %s88, 1
          %s389 = smul.addr %s388, 128
          %s390 = scalar_lea.vmem [#allocation7], %s389
          %s392 = ssub.s32 2048, 2048
          %393 = vsyncadd %s387, %s392
          %s394 = smul.addr %s26, 16
          %s395 = smul.addr %s394, 128
          %s396 = scalar_lea.hbm %s2, %s395
          %s397 = sshll.u32 %s390, 4
          %s398 = int_to_ptr.vmem [resolvable:$true] %s397
          %403 = dma.hbm_to_vmem [thread:$0]  %s396, 2048, %s398, %s387, 256, 256, 16
        $region60: #{tpu_custom_call.1} parent=47 // pred_fallthru
          _
      $region48: #{tpu_custom_call.1} parent=5 // pred_fallthru
        _
      %p404 = scmp.le.s32.totalorder 1, %s26
      %p405 = scmp.lt.s32.totalorder %s26, 3
      %p406 = pnand %p404, %p405
      %p407 = pneg %p406
      // Predicated region
      $region61: #{tpu_custom_call.1} parent=5 // pred_check
        _
      $region62: #{tpu_custom_call.1} parent=5 // pred_check_branch
        %409 = sbr.rel (%p406) target = $region64
      $region63: #{tpu_custom_call.1} parent=5 // pred_region
        %s410 = ssub.s32 %s26, 1
        %s411 = sand.u32 %s39, 1
        %s412 = scalar_lea.sflag [#allocation3], %s411
        %s413 = sand.u32 %s39, 1
        %s414 = smul.addr %s413, 64
        %s415 = scalar_lea.vmem [#allocation2], %s414
        // Predicated region
        $region65: #{tpu_custom_call.1} parent=63 // pred_check
          %p416 = pneg %p52
        $region66: #{tpu_custom_call.1} parent=63 // pred_check_branch
          %418 = sbr.rel (%p416) target = $region68
        $region67: #{tpu_custom_call.1} parent=63 // pred_region
          %419 = dma.done %s412, 1024
        $region68: #{tpu_custom_call.1} parent=63 // pred_fallthru
          _
        %s420 = sand.u32 %s31, 1
        %s421 = scalar_lea.sflag [#allocation6], %s420
        %s422 = sand.u32 %s65, 1
        %s423 = smul.addr %s422, 128
        %s424 = scalar_lea.vmem [#allocation5], %s423
        // Predicated region
        $region69: #{tpu_custom_call.1} parent=63 // pred_check
          %p425 = pneg %p78
        $region70: #{tpu_custom_call.1} parent=63 // pred_check_branch
          %427 = sbr.rel (%p425) target = $region72
        $region71: #{tpu_custom_call.1} parent=63 // pred_region
          %428 = dma.done %s421, 2048
        $region72: #{tpu_custom_call.1} parent=63 // pred_fallthru
          _
        %s429 = sand.u32 %s31, 1
        %s430 = scalar_lea.sflag [#allocation6], %s429
        %s431 = sand.u32 %s91, 1
        %s432 = smul.addr %s431, 128
        %s433 = scalar_lea.vmem [#allocation7], %s432
        // Predicated region
        $region73: #{tpu_custom_call.1} parent=63 // pred_check
          %p434 = pneg %p104
        $region74: #{tpu_custom_call.1} parent=63 // pred_check_branch
          %436 = sbr.rel (%p434) target = $region76
        $region75: #{tpu_custom_call.1} parent=63 // pred_region
          %437 = dma.done %s430, 2048
        $region76: #{tpu_custom_call.1} parent=63 // pred_fallthru
          _
        %s438 = sand.u32 %s39, 1
        %s439 = scalar_lea.sflag [#allocation3], %s438
        %s440 = sand.u32 %s39, 1
        %s441 = smul.addr %s440, 64
        %s442 = scalar_lea.vmem [#allocation2], %s441
        %p443 = pneg %p52
        %p444 = pneg %p49
        %s445 = sand.u32 %s31, 1
        %s446 = scalar_lea.sflag [#allocation6], %s445
        %s447 = sand.u32 %s65, 1
        %s448 = smul.addr %s447, 128
        %s449 = scalar_lea.vmem [#allocation5], %s448
        %p450 = pneg %p78
        %p451 = pneg %p75
        %s452 = sand.u32 %s31, 1
        %s453 = scalar_lea.sflag [#allocation6], %s452
        %s454 = sand.u32 %s91, 1
        %s455 = smul.addr %s454, 128
        %s456 = scalar_lea.vmem [#allocation7], %s455
        %p457 = pneg %p104
        %p458 = pneg %p101
        %p459 = pneg %p125
        %p460 = pneg %p122
        %p461 = pneg %p146
        %p462 = pneg %p143
        %p463 = pneg %p167
        %p464 = pneg %p164
        %p465 = pneg %p188
        %p466 = pneg %p185
        %p467 = pneg %p209
        %p468 = pneg %p206
        %p469 = pneg %p230
        %p470 = pneg %p227
        %p471 = pneg %p251
        %p472 = pneg %p248
        %p473 = pneg %p272
        %p474 = pneg %p269
        %p475 = pneg %p298
        %p476 = pneg %p295
        %s477 = sand.u32 %s285, 1
        %s478 = scalar_lea.sflag [#allocation4], %s477
        %s479 = sand.u32 %s285, 1
        %s480 = smul.addr %s479, 64
        %s481 = scalar_lea.vmem [#allocation8], %s480
        %v482 = vld [vmem:[%s415] sm:$0xff]
        %v483 = vld [vmem:[%s415 + $0x8] sm:$0xff]
        %v484 = vld [vmem:[%s415 + $0x10] sm:$0xff]
        %v485 = vld [vmem:[%s415 + $0x18] sm:$0xff]
        %v486 = vld [vmem:[%s415 + $0x20] sm:$0xff]
        %v487 = vld [vmem:[%s415 + $0x28] sm:$0xff]
        %v488 = vld [vmem:[%s415 + $0x30] sm:$0xff]
        %v489 = vld [vmem:[%s415 + $0x38] sm:$0xff]
        %v490 = vld [vmem:[%s3] sm:$0x1]
        %v492 = vlaneseq
        %v493 = vshrl.u32 %v492, 7
        %v494 = vsub.s32 0, %v493
        %v495 = vrot.slane %v490, %v494
        %v497 = vmul.f32 %v482, %v495
        %v498 = vmul.f32 %v483, %v495
        %v499 = vmul.f32 %v484, %v495
        %v500 = vmul.f32 %v485, %v495
        %v501 = vmul.f32 %v486, %v495
        %v502 = vmul.f32 %v487, %v495
        %v503 = vmul.f32 %v488, %v495
        %v504 = vmul.f32 %v489, %v495
        %v505 = vld [vmem:[%s4] sm:$0x1]
        %v507 = vlaneseq
        %v508 = vshrl.u32 %v507, 7
        %v509 = vsub.s32 0, %v508
        %v510 = vrot.slane %v505, %v509
        %v512 = vadd.f32 %v497, %v510
        %v513 = vadd.f32 %v498, %v510
        %v514 = vadd.f32 %v499, %v510
        %v515 = vadd.f32 %v500, %v510
        %v516 = vadd.f32 %v501, %v510
        %v517 = vadd.f32 %v502, %v510
        %v518 = vadd.f32 %v503, %v510
        %v519 = vadd.f32 %v504, %v510
        %v520 = vld [vmem:[%s424] sm:$0xff]
        %v521 = vld [vmem:[%s424 + $0x8] sm:$0xff]
        %v522 = vld [vmem:[%s424 + $0x10] sm:$0xff]
        %v523 = vld [vmem:[%s424 + $0x18] sm:$0xff]
        %v524 = vld [vmem:[%s424 + $0x20] sm:$0xff]
        %v525 = vld [vmem:[%s424 + $0x28] sm:$0xff]
        %v526 = vld [vmem:[%s424 + $0x30] sm:$0xff]
        %v527 = vld [vmem:[%s424 + $0x38] sm:$0xff]
        %v528 = vld [vmem:[%s424 + $0x40] sm:$0xff]
        %v529 = vld [vmem:[%s424 + $0x48] sm:$0xff]
        %v530 = vld [vmem:[%s424 + $0x50] sm:$0xff]
        %v531 = vld [vmem:[%s424 + $0x58] sm:$0xff]
        %v532 = vld [vmem:[%s424 + $0x60] sm:$0xff]
        %v533 = vld [vmem:[%s424 + $0x68] sm:$0xff]
        %v534 = vld [vmem:[%s424 + $0x70] sm:$0xff]
        %v535 = vld [vmem:[%s424 + $0x78] sm:$0xff]
        %v536 = vld [vmem:[%s5] sm:$0x3]
        %v538 = vlaneseq
        %v539 = vshrl.u32 %v538, 7
        %v540 = vsub.s32 0, %v539
        %v541 = vrot.slane %v536, %v540
        %v542 = vlaneseq
        %v543 = vshrl.u32 %v542, 7
        %v544 = vsub.s32 1, %v543
        %v545 = vrot.slane %v536, %v544
        %v548 = vmul.f32 %v520, %v541
        %v549 = vmul.f32 %v521, %v545
        %v550 = vmul.f32 %v522, %v541
        %v551 = vmul.f32 %v523, %v545
        %v552 = vmul.f32 %v524, %v541
        %v553 = vmul.f32 %v525, %v545
        %v554 = vmul.f32 %v526, %v541
        %v555 = vmul.f32 %v527, %v545
        %v556 = vmul.f32 %v528, %v541
        %v557 = vmul.f32 %v529, %v545
        %v558 = vmul.f32 %v530, %v541
        %v559 = vmul.f32 %v531, %v545
        %v560 = vmul.f32 %v532, %v541
        %v561 = vmul.f32 %v533, %v545
        %v562 = vmul.f32 %v534, %v541
        %v563 = vmul.f32 %v535, %v545
        %v564 = vld [vmem:[%s6] sm:$0x3]
        %v566 = vlaneseq
        %v567 = vshrl.u32 %v566, 7
        %v568 = vsub.s32 0, %v567
        %v569 = vrot.slane %v564, %v568
        %v570 = vlaneseq
        %v571 = vshrl.u32 %v570, 7
        %v572 = vsub.s32 1, %v571
        %v573 = vrot.slane %v564, %v572
        %v576 = vadd.f32 %v548, %v569
        %v577 = vadd.f32 %v549, %v573
        %v578 = vadd.f32 %v550, %v569
        %v579 = vadd.f32 %v551, %v573
        %v580 = vadd.f32 %v552, %v569
        %v581 = vadd.f32 %v553, %v573
        %v582 = vadd.f32 %v554, %v569
        %v583 = vadd.f32 %v555, %v573
        %v584 = vadd.f32 %v556, %v569
        %v585 = vadd.f32 %v557, %v573
        %v586 = vadd.f32 %v558, %v569
        %v587 = vadd.f32 %v559, %v573
        %v588 = vadd.f32 %v560, %v569
        %v589 = vadd.f32 %v561, %v573
        %v590 = vadd.f32 %v562, %v569
        %v591 = vadd.f32 %v563, %v573
        %v592 = vld [vmem:[%s433] sm:$0xff]
        %v593 = vld [vmem:[%s433 + $0x8] sm:$0xff]
        %v594 = vld [vmem:[%s433 + $0x10] sm:$0xff]
        %v595 = vld [vmem:[%s433 + $0x18] sm:$0xff]
        %v596 = vld [vmem:[%s433 + $0x20] sm:$0xff]
        %v597 = vld [vmem:[%s433 + $0x28] sm:$0xff]
        %v598 = vld [vmem:[%s433 + $0x30] sm:$0xff]
        %v599 = vld [vmem:[%s433 + $0x38] sm:$0xff]
        %v600 = vld [vmem:[%s433 + $0x40] sm:$0xff]
        %v601 = vld [vmem:[%s433 + $0x48] sm:$0xff]
        %v602 = vld [vmem:[%s433 + $0x50] sm:$0xff]
        %v603 = vld [vmem:[%s433 + $0x58] sm:$0xff]
        %v604 = vld [vmem:[%s433 + $0x60] sm:$0xff]
        %v605 = vld [vmem:[%s433 + $0x68] sm:$0xff]
        %v606 = vld [vmem:[%s433 + $0x70] sm:$0xff]
        %v607 = vld [vmem:[%s433 + $0x78] sm:$0xff]
        %v608 = vld [vmem:[%s7] sm:$0x3]
        %v610 = vlaneseq
        %v611 = vshrl.u32 %v610, 7
        %v612 = vsub.s32 0, %v611
        %v613 = vrot.slane %v608, %v612
        %v614 = vlaneseq
        %v615 = vshrl.u32 %v614, 7
        %v616 = vsub.s32 1, %v615
        %v617 = vrot.slane %v608, %v616
        %v620 = vmul.f32 %v592, %v613
        %v621 = vmul.f32 %v593, %v617
        %v622 = vmul.f32 %v594, %v613
        %v623 = vmul.f32 %v595, %v617
        %v624 = vmul.f32 %v596, %v613
        %v625 = vmul.f32 %v597, %v617
        %v626 = vmul.f32 %v598, %v613
        %v627 = vmul.f32 %v599, %v617
        %v628 = vmul.f32 %v600, %v613
        %v629 = vmul.f32 %v601, %v617
        %v630 = vmul.f32 %v602, %v613
        %v631 = vmul.f32 %v603, %v617
        %v632 = vmul.f32 %v604, %v613
        %v633 = vmul.f32 %v605, %v617
        %v634 = vmul.f32 %v606, %v613
        %v635 = vmul.f32 %v607, %v617
        %v636 = vld [vmem:[%s8] sm:$0x3]
        %v638 = vlaneseq
        %v639 = vshrl.u32 %v638, 7
        %v640 = vsub.s32 0, %v639
        %v641 = vrot.slane %v636, %v640
        %v642 = vlaneseq
        %v643 = vshrl.u32 %v642, 7
        %v644 = vsub.s32 1, %v643
        %v645 = vrot.slane %v636, %v644
        %v648 = vadd.f32 %v620, %v641
        %v649 = vadd.f32 %v621, %v645
        %v650 = vadd.f32 %v622, %v641
        %v651 = vadd.f32 %v623, %v645
        %v652 = vadd.f32 %v624, %v641
        %v653 = vadd.f32 %v625, %v645
        %v654 = vadd.f32 %v626, %v641
        %v655 = vadd.f32 %v627, %v645
        %v656 = vadd.f32 %v628, %v641
        %v657 = vadd.f32 %v629, %v645
        %v658 = vadd.f32 %v630, %v641
        %v659 = vadd.f32 %v631, %v645
        %v660 = vadd.f32 %v632, %v641
        %v661 = vadd.f32 %v633, %v645
        %v662 = vadd.f32 %v634, %v641
        %v663 = vadd.f32 %v635, %v645
        %664 = vxpose.xlu0.b32.start [1/16] %v576, 128
        %665 = vxpose.xlu0.b32.cont [2/16] %v578, 128
        %666 = vxpose.xlu0.b32.cont [3/16] %v580, 128
        %667 = vxpose.xlu0.b32.cont [4/16] %v582, 128
        %668 = vxpose.xlu0.b32.cont [5/16] %v584, 128
        %669 = vxpose.xlu0.b32.cont [6/16] %v586, 128
        %670 = vxpose.xlu0.b32.cont [7/16] %v588, 128
        %671 = vxpose.xlu0.b32.cont [8/16] %v590, 128
        %672 = vxpose.xlu0.b32.cont [9/16] 0.0, 128
        %673 = vxpose.xlu0.b32.cont [10/16] 0.0, 128
        %674 = vxpose.xlu0.b32.cont [11/16] 0.0, 128
        %675 = vxpose.xlu0.b32.cont [12/16] 0.0, 128
        %676 = vxpose.xlu0.b32.cont [13/16] 0.0, 128
        %677 = vxpose.xlu0.b32.cont [14/16] 0.0, 128
        %678 = vxpose.xlu0.b32.cont [15/16] 0.0, 128
        %679 = vxpose.xlu0.b32.end [16/16] 0.0, 128
        %v680 = vpop.trf.xlu0
        %v681 = vpop.trf.xlu0
        %v682 = vpop.trf.xlu0
        %v683 = vpop.trf.xlu0
        %v684 = vpop.trf.xlu0
        %v685 = vpop.trf.xlu0
        %v686 = vpop.trf.xlu0
        %v687 = vpop.trf.xlu0
        %v688 = vpop.trf.xlu0
        %v689 = vpop.trf.xlu0
        %v690 = vpop.trf.xlu0
        %v691 = vpop.trf.xlu0
        %v692 = vpop.trf.xlu0
        %v693 = vpop.trf.xlu0
        %v694 = vpop.trf.xlu0
        %v695 = vpop.trf.xlu0
        %696 = vxpose.xlu0.b32.start [1/16] %v577, 128
        %697 = vxpose.xlu0.b32.cont [2/16] %v579, 128
        %698 = vxpose.xlu0.b32.cont [3/16] %v581, 128
        %699 = vxpose.xlu0.b32.cont [4/16] %v583, 128
        %700 = vxpose.xlu0.b32.cont [5/16] %v585, 128
        %701 = vxpose.xlu0.b32.cont [6/16] %v587, 128
        %702 = vxpose.xlu0.b32.cont [7/16] %v589, 128
        %703 = vxpose.xlu0.b32.cont [8/16] %v591, 128
        %704 = vxpose.xlu0.b32.cont [9/16] 0.0, 128
        %705 = vxpose.xlu0.b32.cont [10/16] 0.0, 128
        %706 = vxpose.xlu0.b32.cont [11/16] 0.0, 128
        %707 = vxpose.xlu0.b32.cont [12/16] 0.0, 128
        %708 = vxpose.xlu0.b32.cont [13/16] 0.0, 128
        %709 = vxpose.xlu0.b32.cont [14/16] 0.0, 128
        %710 = vxpose.xlu0.b32.cont [15/16] 0.0, 128
        %711 = vxpose.xlu0.b32.end [16/16] 0.0, 128
        %v712 = vpop.trf.xlu0
        %v713 = vpop.trf.xlu0
        %v714 = vpop.trf.xlu0
        %v715 = vpop.trf.xlu0
        %v716 = vpop.trf.xlu0
        %v717 = vpop.trf.xlu0
        %v718 = vpop.trf.xlu0
        %v719 = vpop.trf.xlu0
        %v720 = vpop.trf.xlu0
        %v721 = vpop.trf.xlu0
        %v722 = vpop.trf.xlu0
        %v723 = vpop.trf.xlu0
        %v724 = vpop.trf.xlu0
        %v725 = vpop.trf.xlu0
        %v726 = vpop.trf.xlu0
        %v727 = vpop.trf.xlu0
        %vm728 = vcmask 523264
        %v730 = vsel %vm728, %v680, 0
        %v733 = vsel %vm728, %v681, 0
        %v736 = vsel %vm728, %v682, 0
        %v739 = vsel %vm728, %v683, 0
        %v742 = vsel %vm728, %v684, 0
        %v745 = vsel %vm728, %v685, 0
        %v748 = vsel %vm728, %v686, 0
        %v751 = vsel %vm728, %v687, 0
        %v754 = vsel %vm728, %v688, 0
        %v757 = vsel %vm728, %v689, 0
        %v760 = vsel %vm728, %v690, 0
        %v763 = vsel %vm728, %v691, 0
        %v766 = vsel %vm728, %v692, 0
        %v769 = vsel %vm728, %v693, 0
        %v772 = vsel %vm728, %v694, 0
        %v775 = vsel %vm728, %v695, 0
        %v778 = vsel %vm728, %v712, 0
        %v781 = vsel %vm728, %v713, 0
        %v784 = vsel %vm728, %v714, 0
        %v787 = vsel %vm728, %v715, 0
        %v790 = vsel %vm728, %v716, 0
        %v793 = vsel %vm728, %v717, 0
        %v796 = vsel %vm728, %v718, 0
        %v799 = vsel %vm728, %v719, 0
        %v802 = vsel %vm728, %v720, 0
        %v805 = vsel %vm728, %v721, 0
        %v808 = vsel %vm728, %v722, 0
        %v811 = vsel %vm728, %v723, 0
        %v814 = vsel %vm728, %v724, 0
        %v817 = vsel %vm728, %v725, 0
        %v820 = vsel %vm728, %v726, 0
        %v823 = vsel %vm728, %v727, 0
        %825 = vmatprep.subr.mxu0 0.0
        %826 = vmatpush1.msra.mxu0 %v512
        %827 = vmatprep.subr.mxu0 0.0
        %828 = vmatpush1.msra.mxu0 %v513
        %829 = vmatprep.subr.mxu0 0.0
        %830 = vmatpush1.msra.mxu0 %v514
        %831 = vmatprep.subr.mxu0 0.0
        %832 = vmatpush1.msra.mxu0 %v515
        %833 = vmatprep.subr.mxu0 0.0
        %834 = vmatpush1.msra.mxu0 %v516
        %835 = vmatprep.subr.mxu0 0.0
        %836 = vmatpush1.msra.mxu0 %v517
        %837 = vmatprep.subr.mxu0 0.0
        %838 = vmatpush1.msra.mxu0 %v518
        %839 = vmatprep.subr.mxu0 0.0
        %840 = vmatpush1.msra.mxu0 %v519
        %841 = vmatprep.subr.mxu0 0.0
        %842 = vmatpush1.msra.mxu0 0.0
        %843 = vmatprep.subr.mxu0 0.0
        %844 = vmatpush1.msra.mxu0 0.0
        %845 = vmatprep.subr.mxu0 0.0
        %846 = vmatpush1.msra.mxu0 0.0
        %847 = vmatprep.subr.mxu0 0.0
        %848 = vmatpush1.msra.mxu0 0.0
        %849 = vmatprep.subr.mxu0 0.0
        %850 = vmatpush1.msra.mxu0 0.0
        %851 = vmatprep.subr.mxu0 0.0
        %852 = vmatpush1.msra.mxu0 0.0
        %853 = vmatprep.subr.mxu0 0.0
        %854 = vmatpush1.msra.mxu0 0.0
        %855 = vmatprep.subr.mxu0 0.0
        %856 = vmatpush1.msra.mxu0 0.0
        %857 = vmatprep.subr.mxu0 0.0
        %858 = vmatpush1.msra.mxu0 0.0
        %859 = vmatprep.subr.mxu0 0.0
        %860 = vmatpush1.msra.mxu0 0.0
        %861 = vmatprep.subr.mxu0 0.0
        %862 = vmatpush1.msra.mxu0 0.0
        %863 = vmatprep.subr.mxu0 0.0
        %864 = vmatpush1.msra.mxu0 0.0
        %865 = vmatprep.subr.mxu0 0.0
        %866 = vmatpush1.msra.mxu0 0.0
        %867 = vmatprep.subr.mxu0 0.0
        %868 = vmatpush1.msra.mxu0 0.0
        %869 = vmatprep.subr.mxu0 0.0
        %870 = vmatpush1.msra.mxu0 0.0
        %871 = vmatprep.subr.mxu0 0.0
        %872 = vmatpush1.msra.mxu0 0.0
        %873 = vmatprep.subr.mxu0 0.0
        %874 = vmatpush1.msra.mxu0 0.0
        %875 = vmatprep.subr.mxu0 0.0
        %876 = vmatpush1.msra.mxu0 0.0
        %877 = vmatprep.subr.mxu0 0.0
        %878 = vmatpush1.msra.mxu0 0.0
        %879 = vmatprep.subr.mxu0 0.0
        %880 = vmatpush1.msra.mxu0 0.0
        %881 = vmatprep.subr.mxu0 0.0
        %882 = vmatpush1.msra.mxu0 0.0
        %883 = vmatprep.subr.mxu0 0.0
        %884 = vmatpush1.msra.mxu0 0.0
        %885 = vmatprep.subr.mxu0 0.0
        %886 = vmatpush1.msra.mxu0 0.0
        %887 = vmatprep.subr.mxu0 0.0
        %888 = vmatpush1.msra.mxu0 0.0
        %889 = vmatprep.mubr.f32.mxu0 0.0
        %890 = vmatmul.mubr.f32.gmra.mrb[0].mxu0 %v730
        %v891 = vpop.f32.mrb[0].mxu0
        %v892 = vadd.f32 0.0, %v891
        %v893 = vpop.f32.mrb[0].mxu0
        %894 = vmatprep.mubr.f32.mxu0 0.0
        %895 = vmatmul.mubr.f32.gmra.mrb[0].mxu0 %v733
        %v896 = vpop.f32.mrb[0].mxu0
        %v897 = vadd.f32 0.0, %v896
        %v898 = vpop.f32.mrb[0].mxu0
        %899 = vmatprep.mubr.f32.mxu0 0.0
        %900 = vmatmul.mubr.f32.gmra.mrb[0].mxu0 %v736
        %v901 = vpop.f32.mrb[0].mxu0
        %v902 = vadd.f32 0.0, %v901
        %v903 = vpop.f32.mrb[0].mxu0
        %904 = vmatprep.mubr.f32.mxu0 0.0
        %905 = vmatmul.mubr.f32.gmra.mrb[0].mxu0 %v739
        %v906 = vpop.f32.mrb[0].mxu0
        %v907 = vadd.f32 0.0, %v906
        %v908 = vpop.f32.mrb[0].mxu0
        %909 = vmatprep.mubr.f32.mxu0 0.0
        %910 = vmatmul.mubr.f32.gmra.mrb[0].mxu0 %v742
        %v911 = vpop.f32.mrb[0].mxu0
        %v912 = vadd.f32 0.0, %v911
        %v913 = vpop.f32.mrb[0].mxu0
        %914 = vmatprep.mubr.f32.mxu0 0.0
        %915 = vmatmul.mubr.f32.gmra.mrb[0].mxu0 %v745
        %v916 = vpop.f32.mrb[0].mxu0
        %v917 = vadd.f32 0.0, %v916
        %v918 = vpop.f32.mrb[0].mxu0
        %919 = vmatprep.mubr.f32.mxu0 0.0
        %920 = vmatmul.mubr.f32.gmra.mrb[0].mxu0 %v748
        %v921 = vpop.f32.mrb[0].mxu0
        %v922 = vadd.f32 0.0, %v921
        %v923 = vpop.f32.mrb[0].mxu0
        %924 = vmatprep.mubr.f32.mxu0 0.0
        %925 = vmatmul.mubr.f32.gmra.mrb[0].mxu0 %v751
        %v926 = vpop.f32.mrb[0].mxu0
        %v927 = vadd.f32 0.0, %v926
        %v928 = vpop.f32.mrb[0].mxu0
        %929 = vmatprep.mubr.f32.mxu0 0.0
        %930 = vmatmul.mubr.f32.gmra.mrb[0].mxu0 %v754
        %v931 = vpop.f32.mrb[0].mxu0
        %v932 = vadd.f32 0.0, %v931
        %v933 = vpop.f32.mrb[0].mxu0
        %934 = vmatprep.mubr.f32.mxu0 0.0
        %935 = vmatmul.mubr.f32.gmra.mrb[0].mxu0 %v757
        %v936 = vpop.f32.mrb[0].mxu0
        %v937 = vadd.f32 0.0, %v936
        %v938 = vpop.f32.mrb[0].mxu0
        %939 = vmatprep.mubr.f32.mxu0 0.0
        %940 = vmatmul.mubr.f32.gmra.mrb[0].mxu0 %v760
        %v941 = vpop.f32.mrb[0].mxu0
        %v942 = vadd.f32 0.0, %v941
        %v943 = vpop.f32.mrb[0].mxu0
        %944 = vmatprep.mubr.f32.mxu0 0.0
        %945 = vmatmul.mubr.f32.gmra.mrb[0].mxu0 %v763
        %v946 = vpop.f32.mrb[0].mxu0
        %v947 = vadd.f32 0.0, %v946
        %v948 = vpop.f32.mrb[0].mxu0
        %949 = vmatprep.mubr.f32.mxu0 0.0
        %950 = vmatmul.mubr.f32.gmra.mrb[0].mxu0 %v766
        %v951 = vpop.f32.mrb[0].mxu0
        %v952 = vadd.f32 0.0, %v951
        %v953 = vpop.f32.mrb[0].mxu0
        %954 = vmatprep.mubr.f32.mxu0 0.0
        %955 = vmatmul.mubr.f32.gmra.mrb[0].mxu0 %v769
        %v956 = vpop.f32.mrb[0].mxu0
        %v957 = vadd.f32 0.0, %v956
        %v958 = vpop.f32.mrb[0].mxu0
        %959 = vmatprep.mubr.f32.mxu0 0.0
        %960 = vmatmul.mubr.f32.gmra.mrb[0].mxu0 %v772
        %v961 = vpop.f32.mrb[0].mxu0
        %v962 = vadd.f32 0.0, %v961
        %v963 = vpop.f32.mrb[0].mxu0
        %964 = vmatprep.mubr.f32.mxu0 0.0
        %965 = vmatmul.mubr.f32.gmra.mrb[0].mxu0 %v775
        %v966 = vpop.f32.mrb[0].mxu0
        %v967 = vadd.f32 0.0, %v966
        %v968 = vpop.f32.mrb[0].mxu0
        %969 = vmatprep.mubr.f32.mxu0 0.0
        %970 = vmatmul.mubr.f32.gmra.mrb[0].mxu0 %v778
        %v971 = vpop.f32.mrb[0].mxu0
        %v972 = vadd.f32 0.0, %v971
        %v973 = vpop.f32.mrb[0].mxu0
        %974 = vmatprep.mubr.f32.mxu0 0.0
        %975 = vmatmul.mubr.f32.gmra.mrb[0].mxu0 %v781
        %v976 = vpop.f32.mrb[0].mxu0
        %v977 = vadd.f32 0.0, %v976
        %v978 = vpop.f32.mrb[0].mxu0
        %979 = vmatprep.mubr.f32.mxu0 0.0
        %980 = vmatmul.mubr.f32.gmra.mrb[0].mxu0 %v784
        %v981 = vpop.f32.mrb[0].mxu0
        %v982 = vadd.f32 0.0, %v981
        %v983 = vpop.f32.mrb[0].mxu0
        %984 = vmatprep.mubr.f32.mxu0 0.0
        %985 = vmatmul.mubr.f32.gmra.mrb[0].mxu0 %v787
        %v986 = vpop.f32.mrb[0].mxu0
        %v987 = vadd.f32 0.0, %v986
        %v988 = vpop.f32.mrb[0].mxu0
        %989 = vmatprep.mubr.f32.mxu0 0.0
        %990 = vmatmul.mubr.f32.gmra.mrb[0].mxu0 %v790
        %v991 = vpop.f32.mrb[0].mxu0
        %v992 = vadd.f32 0.0, %v991
        %v993 = vpop.f32.mrb[0].mxu0
        %994 = vmatprep.mubr.f32.mxu0 0.0
        %995 = vmatmul.mubr.f32.gmra.mrb[0].mxu0 %v793
        %v996 = vpop.f32.mrb[0].mxu0
        %v997 = vadd.f32 0.0, %v996
        %v998 = vpop.f32.mrb[0].mxu0
        %999 = vmatprep.mubr.f32.mxu0 0.0
        %1000 = vmatmul.mubr.f32.gmra.mrb[0].mxu0 %v796
        %v1001 = vpop.f32.mrb[0].mxu0
        %v1002 = vadd.f32 0.0, %v1001
        %v1003 = vpop.f32.mrb[0].mxu0
        %1004 = vmatprep.mubr.f32.mxu0 0.0
        %1005 = vmatmul.mubr.f32.gmra.mrb[0].mxu0 %v799
        %v1006 = vpop.f32.mrb[0].mxu0
        %v1007 = vadd.f32 0.0, %v1006
        %v1008 = vpop.f32.mrb[0].mxu0
        %1009 = vmatprep.mubr.f32.mxu0 0.0
        %1010 = vmatmul.mubr.f32.gmra.mrb[0].mxu0 %v802
        %v1011 = vpop.f32.mrb[0].mxu0
        %v1012 = vadd.f32 0.0, %v1011
        %v1013 = vpop.f32.mrb[0].mxu0
        %1014 = vmatprep.mubr.f32.mxu0 0.0
        %1015 = vmatmul.mubr.f32.gmra.mrb[0].mxu0 %v805
        %v1016 = vpop.f32.mrb[0].mxu0
        %v1017 = vadd.f32 0.0, %v1016
        %v1018 = vpop.f32.mrb[0].mxu0
        %1019 = vmatprep.mubr.f32.mxu0 0.0
        %1020 = vmatmul.mubr.f32.gmra.mrb[0].mxu0 %v808
        %v1021 = vpop.f32.mrb[0].mxu0
        %v1022 = vadd.f32 0.0, %v1021
        %v1023 = vpop.f32.mrb[0].mxu0
        %1024 = vmatprep.mubr.f32.mxu0 0.0
        %1025 = vmatmul.mubr.f32.gmra.mrb[0].mxu0 %v811
        %v1026 = vpop.f32.mrb[0].mxu0
        %v1027 = vadd.f32 0.0, %v1026
        %v1028 = vpop.f32.mrb[0].mxu0
        %1029 = vmatprep.mubr.f32.mxu0 0.0
        %1030 = vmatmul.mubr.f32.gmra.mrb[0].mxu0 %v814
        %v1031 = vpop.f32.mrb[0].mxu0
        %v1032 = vadd.f32 0.0, %v1031
        %v1033 = vpop.f32.mrb[0].mxu0
        %1034 = vmatprep.mubr.f32.mxu0 0.0
        %1035 = vmatmul.mubr.f32.gmra.mrb[0].mxu0 %v817
        %v1036 = vpop.f32.mrb[0].mxu0
        %v1037 = vadd.f32 0.0, %v1036
        %v1038 = vpop.f32.mrb[0].mxu0
        %1039 = vmatprep.mubr.f32.mxu0 0.0
        %1040 = vmatmul.mubr.f32.gmra.mrb[0].mxu0 %v820
        %v1041 = vpop.f32.mrb[0].mxu0
        %v1042 = vadd.f32 0.0, %v1041
        %v1043 = vpop.f32.mrb[0].mxu0
        %1044 = vmatprep.mubr.f32.mxu0 0.0
        %1045 = vmatmul.mubr.f32.gmra.mrb[0].mxu0 %v823
        %v1046 = vpop.f32.mrb[0].mxu0
        %v1047 = vadd.f32 0.0, %v1046
        %v1048 = vpop.f32.mrb[0].mxu0
        %1049 = vdwg.mxu0
        %v1050 = vmul.f32 %v892, 0.0625
        %v1051 = vmul.f32 %v897, 0.0625
        %v1052 = vmul.f32 %v902, 0.0625
        %v1053 = vmul.f32 %v907, 0.0625
        %v1054 = vmul.f32 %v912, 0.0625
        %v1055 = vmul.f32 %v917, 0.0625
        %v1056 = vmul.f32 %v922, 0.0625
        %v1057 = vmul.f32 %v927, 0.0625
        %v1058 = vmul.f32 %v932, 0.0625
        %v1059 = vmul.f32 %v937, 0.0625
        %v1060 = vmul.f32 %v942, 0.0625
        %v1061 = vmul.f32 %v947, 0.0625
        %v1062 = vmul.f32 %v952, 0.0625
        %v1063 = vmul.f32 %v957, 0.0625
        %v1064 = vmul.f32 %v962, 0.0625
        %v1065 = vmul.f32 %v967, 0.0625
        %v1066 = vmul.f32 %v972, 0.0625
        %v1067 = vmul.f32 %v977, 0.0625
        %v1068 = vmul.f32 %v982, 0.0625
        %v1069 = vmul.f32 %v987, 0.0625
        %v1070 = vmul.f32 %v992, 0.0625
        %v1071 = vmul.f32 %v997, 0.0625
        %v1072 = vmul.f32 %v1002, 0.0625
        %v1073 = vmul.f32 %v1007, 0.0625
        %v1074 = vmul.f32 %v1012, 0.0625
        %v1075 = vmul.f32 %v1017, 0.0625
        %v1076 = vmul.f32 %v1022, 0.0625
        %v1077 = vmul.f32 %v1027, 0.0625
        %v1078 = vmul.f32 %v1032, 0.0625
        %v1079 = vmul.f32 %v1037, 0.0625
        %v1080 = vmul.f32 %v1042, 0.0625
        %v1081 = vmul.f32 %v1047, 0.0625
        %v1082 = vmax.f32 %v1050, %v1054
        %v1083 = vmax.f32 %v1051, %v1055
        %v1084 = vmax.f32 %v1052, %v1056
        %v1085 = vmax.f32 %v1053, %v1057
        %v1086 = vmax.f32 %v1082, %v1058
        %v1087 = vmax.f32 %v1083, %v1059
        %v1088 = vmax.f32 %v1084, %v1060
        %v1089 = vmax.f32 %v1085, %v1061
        %v1090 = vmax.f32 %v1086, %v1062
        %v1091 = vmax.f32 %v1087, %v1063
        %v1092 = vmax.f32 %v1088, %v1064
        %v1093 = vmax.f32 %v1089, %v1065
        %v1094 = vmax.f32 %v1090, %v1066
        %v1095 = vmax.f32 %v1091, %v1067
        %v1096 = vmax.f32 %v1092, %v1068
        %v1097 = vmax.f32 %v1093, %v1069
        %v1098 = vmax.f32 %v1094, %v1070
        %v1099 = vmax.f32 %v1095, %v1071
        %v1100 = vmax.f32 %v1096, %v1072
        %v1101 = vmax.f32 %v1097, %v1073
        %v1102 = vmax.f32 %v1098, %v1074
        %v1103 = vmax.f32 %v1099, %v1075
        %v1104 = vmax.f32 %v1100, %v1076
        %v1105 = vmax.f32 %v1101, %v1077
        %v1106 = vmax.f32 %v1102, %v1078
        %v1107 = vmax.f32 %v1103, %v1079
        %v1108 = vmax.f32 %v1104, %v1080
        %v1109 = vmax.f32 %v1105, %v1081
        %v1110 = vmax.f32 %v1106, %v1107
        %v1111 = vmax.f32 %v1108, %v1109
        %v1112 = vmax.f32 %v1110, %v1111
        %v1113 = vrot.slane %v1112, 4
        %v1114 = vmax.f32 %v1112, %v1113
        %v1115 = vrot.slane %v1114, 2
        %v1116 = vmax.f32 %v1114, %v1115
        %v1117 = vrot.slane %v1116, 1
        %v1118 = vmax.f32 %v1116, %v1117
        %v1119 = vsub.f32 %v1050, %v1118
        %v1120 = vsub.f32 %v1051, %v1118
        %v1121 = vsub.f32 %v1052, %v1118
        %v1122 = vsub.f32 %v1053, %v1118
        %v1123 = vsub.f32 %v1054, %v1118
        %v1124 = vsub.f32 %v1055, %v1118
        %v1125 = vsub.f32 %v1056, %v1118
        %v1126 = vsub.f32 %v1057, %v1118
        %v1127 = vsub.f32 %v1058, %v1118
        %v1128 = vsub.f32 %v1059, %v1118
        %v1129 = vsub.f32 %v1060, %v1118
        %v1130 = vsub.f32 %v1061, %v1118
        %v1131 = vsub.f32 %v1062, %v1118
        %v1132 = vsub.f32 %v1063, %v1118
        %v1133 = vsub.f32 %v1064, %v1118
        %v1134 = vsub.f32 %v1065, %v1118
        %v1135 = vsub.f32 %v1066, %v1118
        %v1136 = vsub.f32 %v1067, %v1118
        %v1137 = vsub.f32 %v1068, %v1118
        %v1138 = vsub.f32 %v1069, %v1118
        %v1139 = vsub.f32 %v1070, %v1118
        %v1140 = vsub.f32 %v1071, %v1118
        %v1141 = vsub.f32 %v1072, %v1118
        %v1142 = vsub.f32 %v1073, %v1118
        %v1143 = vsub.f32 %v1074, %v1118
        %v1144 = vsub.f32 %v1075, %v1118
        %v1145 = vsub.f32 %v1076, %v1118
        %v1146 = vsub.f32 %v1077, %v1118
        %v1147 = vsub.f32 %v1078, %v1118
        %v1148 = vsub.f32 %v1079, %v1118
        %v1149 = vsub.f32 %v1080, %v1118
        %v1150 = vsub.f32 %v1081, %v1118
        %v1151 = vmul.f32 %v1119, 1.442695
        %v1152 = vpow.pop %v1151
        %v1153 = vmul.f32 %v1120, 1.442695
        %v1154 = vpow.pop %v1153
        %v1155 = vmul.f32 %v1121, 1.442695
        %v1156 = vpow.pop %v1155
        %v1157 = vmul.f32 %v1122, 1.442695
        %v1158 = vpow.pop %v1157
        %v1159 = vmul.f32 %v1123, 1.442695
        %v1160 = vpow.pop %v1159
        %v1161 = vmul.f32 %v1124, 1.442695
        %v1162 = vpow.pop %v1161
        %v1163 = vmul.f32 %v1125, 1.442695
        %v1164 = vpow.pop %v1163
        %v1165 = vmul.f32 %v1126, 1.442695
        %v1166 = vpow.pop %v1165
        %v1167 = vmul.f32 %v1127, 1.442695
        %v1168 = vpow.pop %v1167
        %v1169 = vmul.f32 %v1128, 1.442695
        %v1170 = vpow.pop %v1169
        %v1171 = vmul.f32 %v1129, 1.442695
        %v1172 = vpow.pop %v1171
        %v1173 = vmul.f32 %v1130, 1.442695
        %v1174 = vpow.pop %v1173
        %v1175 = vmul.f32 %v1131, 1.442695
        %v1176 = vpow.pop %v1175
        %v1177 = vmul.f32 %v1132, 1.442695
        %v1178 = vpow.pop %v1177
        %v1179 = vmul.f32 %v1133, 1.442695
        %v1180 = vpow.pop %v1179
        %v1181 = vmul.f32 %v1134, 1.442695
        %v1182 = vpow.pop %v1181
        %v1183 = vmul.f32 %v1135, 1.442695
        %v1184 = vpow.pop %v1183
        %v1185 = vmul.f32 %v1136, 1.442695
        %v1186 = vpow.pop %v1185
        %v1187 = vmul.f32 %v1137, 1.442695
        %v1188 = vpow.pop %v1187
        %v1189 = vmul.f32 %v1138, 1.442695
        %v1190 = vpow.pop %v1189
        %v1191 = vmul.f32 %v1139, 1.442695
        %v1192 = vpow.pop %v1191
        %v1193 = vmul.f32 %v1140, 1.442695
        %v1194 = vpow.pop %v1193
        %v1195 = vmul.f32 %v1141, 1.442695
        %v1196 = vpow.pop %v1195
        %v1197 = vmul.f32 %v1142, 1.442695
        %v1198 = vpow.pop %v1197
        %v1199 = vmul.f32 %v1143, 1.442695
        %v1200 = vpow.pop %v1199
        %v1201 = vmul.f32 %v1144, 1.442695
        %v1202 = vpow.pop %v1201
        %v1203 = vmul.f32 %v1145, 1.442695
        %v1204 = vpow.pop %v1203
        %v1205 = vmul.f32 %v1146, 1.442695
        %v1206 = vpow.pop %v1205
        %v1207 = vmul.f32 %v1147, 1.442695
        %v1208 = vpow.pop %v1207
        %v1209 = vmul.f32 %v1148, 1.442695
        %v1210 = vpow.pop %v1209
        %v1211 = vmul.f32 %v1149, 1.442695
        %v1212 = vpow.pop %v1211
        %v1213 = vmul.f32 %v1150, 1.442695
        %v1214 = vpow.pop %v1213
        %v1215 = vadd.f32 %v1152, %v1154
        %v1216 = vadd.f32 %v1215, %v1156
        %v1217 = vadd.f32 %v1216, %v1158
        %v1218 = vadd.f32 %v1217, %v1160
        %v1219 = vadd.f32 %v1218, %v1162
        %v1220 = vadd.f32 %v1219, %v1164
        %v1221 = vadd.f32 %v1220, %v1166
        %v1222 = vadd.f32 %v1221, %v1168
        %v1223 = vadd.f32 %v1222, %v1170
        %v1224 = vadd.f32 %v1223, %v1172
        %v1225 = vadd.f32 %v1224, %v1174
        %v1226 = vadd.f32 %v1225, %v1176
        %v1227 = vadd.f32 %v1226, %v1178
        %v1228 = vadd.f32 %v1227, %v1180
        %v1229 = vadd.f32 %v1228, %v1182
        %v1230 = vadd.f32 %v1229, %v1184
        %v1231 = vadd.f32 %v1230, %v1186
        %v1232 = vadd.f32 %v1231, %v1188
        %v1233 = vadd.f32 %v1232, %v1190
        %v1234 = vadd.f32 %v1233, %v1192
        %v1235 = vadd.f32 %v1234, %v1194
        %v1236 = vadd.f32 %v1235, %v1196
        %v1237 = vadd.f32 %v1236, %v1198
        %v1238 = vadd.f32 %v1237, %v1200
        %v1239 = vadd.f32 %v1238, %v1202
        %v1240 = vadd.f32 %v1239, %v1204
        %v1241 = vadd.f32 %v1240, %v1206
        %v1242 = vadd.f32 %v1241, %v1208
        %v1243 = vadd.f32 %v1242, %v1210
        %v1244 = vadd.f32 %v1243, %v1212
        %v1245 = vadd.f32 %v1244, %v1214
        %v1246 = vrot.slane %v1245, 4
        %v1247 = vadd.f32 %v1245, %v1246
        %v1248 = vrot.slane %v1247, 2
        %v1249 = vadd.f32 %v1247, %v1248
        %v1250 = vrot.slane %v1249, 1
        %v1251 = vadd.f32 %v1249, %v1250
        %v1252 = vrcp.pop %v1251
        %v1253 = vmul.f32 %v1152, %v1252
        %v1254 = vmul.f32 %v1154, %v1252
        %v1255 = vmul.f32 %v1156, %v1252
        %v1256 = vmul.f32 %v1158, %v1252
        %v1257 = vmul.f32 %v1160, %v1252
        %v1258 = vmul.f32 %v1162, %v1252
        %v1259 = vmul.f32 %v1164, %v1252
        %v1260 = vmul.f32 %v1166, %v1252
        %v1261 = vmul.f32 %v1168, %v1252
        %v1262 = vmul.f32 %v1170, %v1252
        %v1263 = vmul.f32 %v1172, %v1252
        %v1264 = vmul.f32 %v1174, %v1252
        %v1265 = vmul.f32 %v1176, %v1252
        %v1266 = vmul.f32 %v1178, %v1252
        %v1267 = vmul.f32 %v1180, %v1252
        %v1268 = vmul.f32 %v1182, %v1252
        %v1269 = vmul.f32 %v1184, %v1252
        %v1270 = vmul.f32 %v1186, %v1252
        %v1271 = vmul.f32 %v1188, %v1252
        %v1272 = vmul.f32 %v1190, %v1252
        %v1273 = vmul.f32 %v1192, %v1252
        %v1274 = vmul.f32 %v1194, %v1252
        %v1275 = vmul.f32 %v1196, %v1252
        %v1276 = vmul.f32 %v1198, %v1252
        %v1277 = vmul.f32 %v1200, %v1252
        %v1278 = vmul.f32 %v1202, %v1252
        %v1279 = vmul.f32 %v1204, %v1252
        %v1280 = vmul.f32 %v1206, %v1252
        %v1281 = vmul.f32 %v1208, %v1252
        %v1282 = vmul.f32 %v1210, %v1252
        %v1283 = vmul.f32 %v1212, %v1252
        %v1284 = vmul.f32 %v1214, %v1252
        %1285 = vmatprep.subr.mxu0 0.0
        %1286 = vmatpush1.msra.mxu0 %v1253
        %1287 = vmatprep.subr.mxu0 0.0
        %1288 = vmatpush1.msra.mxu0 %v1254
        %1289 = vmatprep.subr.mxu0 0.0
        %1290 = vmatpush1.msra.mxu0 %v1255
        %1291 = vmatprep.subr.mxu0 0.0
        %1292 = vmatpush1.msra.mxu0 %v1256
        %1293 = vmatprep.subr.mxu0 0.0
        %1294 = vmatpush1.msra.mxu0 %v1257
        %1295 = vmatprep.subr.mxu0 0.0
        %1296 = vmatpush1.msra.mxu0 %v1258
        %1297 = vmatprep.subr.mxu0 0.0
        %1298 = vmatpush1.msra.mxu0 %v1259
        %1299 = vmatprep.subr.mxu0 0.0
        %1300 = vmatpush1.msra.mxu0 %v1260
        %1301 = vmatprep.subr.mxu0 0.0
        %1302 = vmatpush1.msra.mxu0 %v1261
        %1303 = vmatprep.subr.mxu0 0.0
        %1304 = vmatpush1.msra.mxu0 %v1262
        %1305 = vmatprep.subr.mxu0 0.0
        %1306 = vmatpush1.msra.mxu0 %v1263
        %1307 = vmatprep.subr.mxu0 0.0
        %1308 = vmatpush1.msra.mxu0 %v1264
        %1309 = vmatprep.subr.mxu0 0.0
        %1310 = vmatpush1.msra.mxu0 %v1265
        %1311 = vmatprep.subr.mxu0 0.0
        %1312 = vmatpush1.msra.mxu0 %v1266
        %1313 = vmatprep.subr.mxu0 0.0
        %1314 = vmatpush1.msra.mxu0 %v1267
        %1315 = vmatprep.subr.mxu0 0.0
        %1316 = vmatpush1.msra.mxu0 %v1268
        %1317 = vmatprep.subr.mxu0 0.0
        %1318 = vmatpush1.msra.mxu0 %v1269
        %1319 = vmatprep.subr.mxu0 0.0
        %1320 = vmatpush1.msra.mxu0 %v1270
        %1321 = vmatprep.subr.mxu0 0.0
        %1322 = vmatpush1.msra.mxu0 %v1271
        %1323 = vmatprep.subr.mxu0 0.0
        %1324 = vmatpush1.msra.mxu0 %v1272
        %1325 = vmatprep.subr.mxu0 0.0
        %1326 = vmatpush1.msra.mxu0 %v1273
        %1327 = vmatprep.subr.mxu0 0.0
        %1328 = vmatpush1.msra.mxu0 %v1274
        %1329 = vmatprep.subr.mxu0 0.0
        %1330 = vmatpush1.msra.mxu0 %v1275
        %1331 = vmatprep.subr.mxu0 0.0
        %1332 = vmatpush1.msra.mxu0 %v1276
        %1333 = vmatprep.subr.mxu0 0.0
        %1334 = vmatpush1.msra.mxu0 %v1277
        %1335 = vmatprep.subr.mxu0 0.0
        %1336 = vmatpush1.msra.mxu0 %v1278
        %1337 = vmatprep.subr.mxu0 0.0
        %1338 = vmatpush1.msra.mxu0 %v1279
        %1339 = vmatprep.subr.mxu0 0.0
        %1340 = vmatpush1.msra.mxu0 %v1280
        %1341 = vmatprep.subr.mxu0 0.0
        %1342 = vmatpush1.msra.mxu0 %v1281
        %1343 = vmatprep.subr.mxu0 0.0
        %1344 = vmatpush1.msra.mxu0 %v1282
        %1345 = vmatprep.subr.mxu0 0.0
        %1346 = vmatpush1.msra.mxu0 %v1283
        %1347 = vmatprep.subr.mxu0 0.0
        %1348 = vmatpush1.msra.mxu0 %v1284
        %1349 = vmatprep.mubr.f32.mxu0 %v649
        %1350 = vmatmul.mubr.f32.gmra.mrb[0].mxu0 %v648
        %v1351 = vpop.f32.mrb[0].mxu0
        %v1352 = vadd.f32 0.0, %v1351
        %v1353 = vpop.f32.mrb[0].mxu0
        %1354 = vmatprep.mubr.f32.mxu0 %v651
        %1355 = vmatmul.mubr.f32.gmra.mrb[0].mxu0 %v650
        %v1356 = vpop.f32.mrb[0].mxu0
        %v1357 = vadd.f32 0.0, %v1356
        %v1358 = vpop.f32.mrb[0].mxu0
        %1359 = vmatprep.mubr.f32.mxu0 %v653
        %1360 = vmatmul.mubr.f32.gmra.mrb[0].mxu0 %v652
        %v1361 = vpop.f32.mrb[0].mxu0
        %v1362 = vadd.f32 0.0, %v1361
        %v1363 = vpop.f32.mrb[0].mxu0
        %1364 = vmatprep.mubr.f32.mxu0 %v655
        %1365 = vmatmul.mubr.f32.gmra.mrb[0].mxu0 %v654
        %v1366 = vpop.f32.mrb[0].mxu0
        %v1367 = vadd.f32 0.0, %v1366
        %v1368 = vpop.f32.mrb[0].mxu0
        %1369 = vmatprep.mubr.f32.mxu0 %v657
        %1370 = vmatmul.mubr.f32.gmra.mrb[0].mxu0 %v656
        %v1371 = vpop.f32.mrb[0].mxu0
        %v1372 = vadd.f32 0.0, %v1371
        %v1373 = vpop.f32.mrb[0].mxu0
        %1374 = vmatprep.mubr.f32.mxu0 %v659
        %1375 = vmatmul.mubr.f32.gmra.mrb[0].mxu0 %v658
        %v1376 = vpop.f32.mrb[0].mxu0
        %v1377 = vadd.f32 0.0, %v1376
        %v1378 = vpop.f32.mrb[0].mxu0
        %1379 = vmatprep.mubr.f32.mxu0 %v661
        %1380 = vmatmul.mubr.f32.gmra.mrb[0].mxu0 %v660
        %v1381 = vpop.f32.mrb[0].mxu0
        %v1382 = vadd.f32 0.0, %v1381
        %v1383 = vpop.f32.mrb[0].mxu0
        %1384 = vmatprep.mubr.f32.mxu0 %v663
        %1385 = vmatmul.mubr.f32.gmra.mrb[0].mxu0 %v662
        %v1386 = vpop.f32.mrb[0].mxu0
        %v1387 = vadd.f32 0.0, %v1386
        %v1388 = vpop.f32.mrb[0].mxu0
        %1389 = vdwg.mxu0
        %v1390 = vld [vmem:[%s9] sm:$0x1]
        %v1392 = vlaneseq
        %v1393 = vshrl.u32 %v1392, 7
        %v1394 = vsub.s32 0, %v1393
        %v1395 = vrot.slane %v1390, %v1394
        %v1397 = vmul.f32 %v1352, %v1395
        %v1398 = vmul.f32 %v1357, %v1395
        %v1399 = vmul.f32 %v1362, %v1395
        %v1400 = vmul.f32 %v1367, %v1395
        %v1401 = vmul.f32 %v1372, %v1395
        %v1402 = vmul.f32 %v1377, %v1395
        %v1403 = vmul.f32 %v1382, %v1395
        %v1404 = vmul.f32 %v1387, %v1395
        %v1405 = vld [vmem:[%s10] sm:$0x1]
        %v1407 = vlaneseq
        %v1408 = vshrl.u32 %v1407, 7
        %v1409 = vsub.s32 0, %v1408
        %v1410 = vrot.slane %v1405, %v1409
        %v1412 = vadd.f32 %v1397, %v1410
        %v1413 = vadd.f32 %v1398, %v1410
        %v1414 = vadd.f32 %v1399, %v1410
        %v1415 = vadd.f32 %v1400, %v1410
        %v1416 = vadd.f32 %v1401, %v1410
        %v1417 = vadd.f32 %v1402, %v1410
        %v1418 = vadd.f32 %v1403, %v1410
        %v1419 = vadd.f32 %v1404, %v1410
        %1420 = vst [vmem:[%s481] sm:$0xff] %v1412
        %1421 = vst [vmem:[%s481 + $0x8] sm:$0xff] %v1413
        %1422 = vst [vmem:[%s481 + $0x10] sm:$0xff] %v1414
        %1423 = vst [vmem:[%s481 + $0x18] sm:$0xff] %v1415
        %1424 = vst [vmem:[%s481 + $0x20] sm:$0xff] %v1416
        %1425 = vst [vmem:[%s481 + $0x28] sm:$0xff] %v1417
        %1426 = vst [vmem:[%s481 + $0x30] sm:$0xff] %v1418
        %1427 = vst [vmem:[%s481 + $0x38] sm:$0xff] %v1419
        %s1428 = sand.u32 %s285, 1
        %s1429 = scalar_lea.sflag [#allocation4], %s1428
        %s1430 = sand.u32 %s285, 1
        %s1431 = smul.addr %s1430, 64
        %s1432 = scalar_lea.vmem [#allocation8], %s1431
        // Predicated region
        $region77: #{tpu_custom_call.1} parent=63 // pred_check
          %p1433 = pneg %p295
        $region78: #{tpu_custom_call.1} parent=63 // pred_check_branch
          %1435 = sbr.rel (%p1433) target = $region80
        $region79: #{tpu_custom_call.1} parent=63 // pred_region
          %s1437 = ssub.s32 1024, 1024
          %1438 = vsyncadd %s1429, %s1437
          %s1439 = smul.addr %s31, 8
          %s1440 = smul.addr %s1439, 128
          %s1441 = scalar_lea.hbm %s11, %s1440
          %s1442 = sshll.u32 %s1432, 4
          %s1443 = int_to_ptr.vmem [resolvable:$true] %s1442
          %1448 = dma.vmem_to_hbm [thread:$0]  %s1443, 1024, %s1441, %s1429, 128, 128, 8
        $region80: #{tpu_custom_call.1} parent=63 // pred_fallthru
          _
      $region64: #{tpu_custom_call.1} parent=5 // pred_fallthru
        _
      %p1449 = scmp.le.s32.totalorder 2, %s26
      // Predicated region
      $region81: #{tpu_custom_call.1} parent=5 // pred_check
        %p1450 = pneg %p1449
      $region82: #{tpu_custom_call.1} parent=5 // pred_check_branch
        %1452 = sbr.rel (%p1450) target = $region84
      $region83: #{tpu_custom_call.1} parent=5 // pred_region
        %s1453 = ssub.s32 %s26, 2
        // Predicated region
        $region85: #{tpu_custom_call.1} parent=83 // pred_check
          %p1454 = pneg %p301
        $region86: #{tpu_custom_call.1} parent=83 // pred_check_branch
          %1456 = sbr.rel (%p1454) target = $region88
        $region87: #{tpu_custom_call.1} parent=83 // pred_region
          %s1457 = sand.u32 %s286, 1
          %s1458 = scalar_lea.sflag [#allocation4], %s1457
          %s1459 = sand.u32 %s286, 1
          %s1460 = smul.addr %s1459, 64
          %s1461 = scalar_lea.vmem [#allocation8], %s1460
          %1462 = dma.done %s1458, 1024
        $region88: #{tpu_custom_call.1} parent=83 // pred_fallthru
          _
      $region84: #{tpu_custom_call.1} parent=5 // pred_fallthru
        _
    $region6: #{tpu_custom_call.1} parent=1 // loop_footer
      %s30 = sadd.s32 1, %s26
    $region7: #{tpu_custom_call.1} parent=1 // loop_footer_branch
      %25 = sbr.rel target = $region3
    $region8: #{tpu_custom_call.1} parent=1 // loop_exit
      _
    %1463 = vsyncpa [#allocation3], 1
    %s1464 = scalar_lea.sflag [#allocation3], 1
    %1465 = vsyncpa %s1464, 1
    %1466 = vsyncpa [#allocation6], 1
    %s1467 = scalar_lea.sflag [#allocation6], 1
    %1468 = vsyncpa %s1467, 1
    %1469 = vsyncpa [#allocation4], 1
    %s1470 = scalar_lea.sflag [#allocation4], 1
    %1471 = vsyncpa %s1470, 1

</llo_original>
